<compile_context>
chip_gen: v7x
topology: tpu7x:2x2x1
jax: 0.10.0
libtpu: 0.0.40
codegen_flags: <defaults>
</compile_context>

<pallas_src>
import jax
import jax.numpy as jnp
from jax import lax
from jax.experimental import pallas as pl
from jax.experimental.pallas import tpu as pltpu

INPUT_SIZE = 4
HIDDEN = 32          # 4*H = 128 -> gate tile exactly fills one vreg lane width
OUTPUT = 1
NUM_LAYERS = 2       # hard-wired 2-layer LSTM (module default)

_T_BLOCK_CAP = 512        # xg block = cap * b_pad * 4H * 4 B (2 MiB at b_pad=8)
_STATIC_UNROLL_MAX = 64   # <= this: full static unroll; above: fori_loop(unroll=8)


def _gates_to_hc(gates, c, H):
    """LSTM nonlinearity. One sigmoid pass over the full (B, 4H) tile + tanh on g."""
    sig = jax.nn.sigmoid(gates)
    i = sig[:, 0 * H:1 * H]
    f = sig[:, 1 * H:2 * H]
    o = sig[:, 3 * H:4 * H]
    g = jnp.tanh(gates[:, 2 * H:3 * H])
    c_new = f * c + i * g
    h_new = o * jnp.tanh(c_new)
    return h_new, c_new


def _make_kernel(t_block, seq, hidden, masked):
    H = hidden

    def kernel(xg_ref, w_hh0_ref, w_ih1_ref, w_hh1_ref, b1_ref,
               w_fc_ref, b_fc_ref, out_ref, h1_ref, c1_ref, h2_ref, c2_ref):
        tb = pl.program_id(0)

        # h0 / c0 are zeros in the PyTorch forward -> init on the first block.
        @pl.when(tb == 0)
        def _():
            h1_ref[...] = jnp.zeros_like(h1_ref)
            c1_ref[...] = jnp.zeros_like(c1_ref)
            h2_ref[...] = jnp.zeros_like(h2_ref)
            c2_ref[...] = jnp.zeros_like(c2_ref)

        # Register-carried state within the block; one VMEM round trip / block.
        h1 = h1_ref[...]
        c1 = c1_ref[...]
        h2 = h2_ref[...]
        c2 = c2_ref[...]
        B = h1.shape[0]

        # bf16 recurrent weights (MXU-native), f32 accumulate + f32 state.
        w_hh0 = w_hh0_ref[...]
        w_ih1 = w_ih1_ref[...]
        w_hh1 = w_hh1_ref[...]
        # Hoist the bias broadcast out of the time loop (no per-iter broadcast).
        b1_b = jnp.broadcast_to(b1_ref[...], (B, 4 * H))

        def step(t, carry):
            h1, c1, h2, c2 = carry
            # Layer-1 recurrent part first: depends only on h2_{t-1}, so this
            # MXU push overlaps the layer-0 matmul + EUP work.
            pre1 = jnp.dot(h2.astype(jnp.bfloat16), w_hh1,
                           preferred_element_type=jnp.float32) + b1_b
            # Layer 0: x @ W_ih0 + b0 was hoisted into the wrapper (xg).
            gates0 = xg_ref[t] + jnp.dot(h1.astype(jnp.bfloat16), w_hh0,
                                         preferred_element_type=jnp.float32)
            h1n, c1n = _gates_to_hc(gates0, c1, H)
            # Layer 1: only a K=H dot on h1_t remains on the serial chain.
            gates1 = pre1 + jnp.dot(h1n.astype(jnp.bfloat16), w_ih1,
                                    preferred_element_type=jnp.float32)
            h2n, c2n = _gates_to_hc(gates1, c2, H)
            if masked:
                # Tail of a padded last block: keep state unchanged (zero xg
                # still equals the bias, so it must not update h/c).
                valid = (tb * t_block + t) < seq
                h1n = jnp.where(valid, h1n, h1)
                c1n = jnp.where(valid, c1n, c1)
                h2n = jnp.where(valid, h2n, h2)
                c2n = jnp.where(valid, c2n, c2)
            return h1n, c1n, h2n, c2n

        carry = (h1, c1, h2, c2)
        if t_block <= _STATIC_UNROLL_MAX:
            for t in range(t_block):                 # statically unrolled
                carry = step(t, carry)
        else:
            carry = lax.fori_loop(0, t_block, step, carry, unroll=8)
        h1, c1, h2, c2 = carry

        h1_ref[...] = h1
        c1_ref[...] = c1
        h2_ref[...] = h2
        c2_ref[...] = c2

        # out = fc(h2_last). N=1 matmul is degenerate on the MXU -> VPU reduce.
        @pl.when(tb == pl.num_programs(0) - 1)
        def _():
            out_ref[...] = (jnp.sum(h2 * w_fc_ref[...], axis=-1, keepdims=True)
                            + b_fc_ref[...]).astype(out_ref.dtype)

    return kernel


def stock_lstm_forward(x, params):
    """x: (batch, seq, input_size) float32. Returns (batch, OUTPUT)."""
    batch, seq, input_size = x.shape
    w_ih0, w_hh0, b0, w_ih1, w_hh1, b1, w_fc, b_fc = params
    H = w_hh0.shape[0]

    # Pad batch (sublane dim) to a multiple of 8 -> full-vreg VPU/EUP/store ops.
    # TODO(synk): for batch >= 16 on v7x, add a CORE_PARALLEL batch-block grid
    # axis so the second TensorCore runs an independent batch slice.
    b_pad = max(8, ((batch + 7) // 8) * 8)
    if b_pad != batch:
        x = jnp.pad(x, ((0, b_pad - batch), (0, 0), (0, 0)))

    # Time blocking: whole-sequence residency (grid=(1,)) when it fits, else
    # fixed 512-step blocks + in-kernel tail masking (never shrink the block).
    t_block = seq if seq <= _T_BLOCK_CAP else _T_BLOCK_CAP
    num_blocks = -(-seq // t_block)
    seq_pad = num_blocks * t_block
    masked = seq_pad != seq

    # Hoisted layer-0 input projection: one matmul over all timesteps, emitted
    # time-major so the BlockSpec slices contiguous (t_block, b_pad, 4H) tiles.
    xg = jnp.einsum('bti,ig->tbg', x.astype(jnp.float32), w_ih0,
                    preferred_element_type=jnp.float32) + b0
    if masked:
        xg = jnp.pad(xg, ((0, seq_pad - seq), (0, 0), (0, 0)))

    # bf16 recurrent-weight operands (MXU-native on v5e/v6e/v7x).
    w_hh0_b = w_hh0.astype(jnp.bfloat16)
    w_ih1_b = w_ih1.astype(jnp.bfloat16)
    w_hh1_b = w_hh1.astype(jnp.bfloat16)
    w_fc_row = w_fc.reshape(1, H)          # FC as a VPU reduction in-kernel

    kernel = _make_kernel(t_block, seq, H, masked)

    def const_spec(shape):
        return pl.BlockSpec(shape, lambda tb: (0,) * len(shape))

    out = pl.pallas_call(
        kernel,
        out_shape=jax.ShapeDtypeStruct((b_pad, OUTPUT), jnp.float32),
        grid_spec=pltpu.PrefetchScalarGridSpec(
            num_scalar_prefetch=0,
            grid=(num_blocks,),
            in_specs=[
                # one time block per grid step (time-major gate inputs)
                pl.BlockSpec((t_block, b_pad, 4 * H), lambda tb: (tb, 0, 0)),
                const_spec(w_hh0_b.shape),
                const_spec(w_ih1_b.shape),
                const_spec(w_hh1_b.shape),
                const_spec(b1.shape),
                const_spec(w_fc_row.shape),
                const_spec(b_fc.shape),
            ],
            out_specs=pl.BlockSpec((b_pad, OUTPUT), lambda tb: (0, 0)),
            scratch_shapes=[
                pltpu.VMEM((b_pad, H), jnp.float32),   # h1
                pltpu.VMEM((b_pad, H), jnp.float32),   # c1
                pltpu.VMEM((b_pad, H), jnp.float32),   # h2
                pltpu.VMEM((b_pad, H), jnp.float32),   # c2
            ],
        ),
        compiler_params=pltpu.CompilerParams(
            dimension_semantics=("arbitrary",)),   # time recurrence: sequential
    )(xg, w_hh0_b, w_ih1_b, w_hh1_b, b1, w_fc_row, b_fc)
    return out[:batch]


def init_params(key, input_size=INPUT_SIZE, hidden=HIDDEN, output=OUTPUT):
    """Deterministic init mimicking PyTorch's uniform(-1/sqrt(H), 1/sqrt(H)).

    Weights are stored pre-transposed for the kernel's x @ W convention, and
    the two LSTM biases (b_ih + b_hh) are pre-summed.
    """
    k = 1.0 / jnp.sqrt(jnp.float32(hidden))
    keys = jax.random.split(key, 10)
    u = lambda kk, shape: jax.random.uniform(kk, shape, jnp.float32, -k, k)

    # layer 0
    w_ih0 = u(keys[0], (input_size, 4 * hidden))
    w_hh0 = u(keys[1], (hidden, 4 * hidden))
    b0 = (u(keys[2], (4 * hidden,)) + u(keys[3], (4 * hidden,))).reshape(1, -1)
    # layer 1
    w_ih1 = u(keys[4], (hidden, 4 * hidden))
    w_hh1 = u(keys[5], (hidden, 4 * hidden))
    b1 = (u(keys[6], (4 * hidden,)) + u(keys[7], (4 * hidden,))).reshape(1, -1)
    # fc
    kf = 1.0 / jnp.sqrt(jnp.float32(hidden))
    w_fc = jax.random.uniform(keys[8], (hidden, output), jnp.float32, -kf, kf)
    b_fc = jax.random.uniform(keys[9], (1, output), jnp.float32, -kf, kf)
    return (w_ih0, w_hh0, b0, w_ih1, w_hh1, b1, w_fc, b_fc)


def ref_forward(x, params):
    """Pure-JAX f32 reference (lax.scan) matching nn.LSTM + Linear semantics."""
    w_ih0, w_hh0, b0, w_ih1, w_hh1, b1, w_fc, b_fc = params
    batch = x.shape[0]
    H = w_hh0.shape[0]

    def cell(x_t, h, c, w_ih, w_hh, b):
        gates = x_t @ w_ih + h @ w_hh + b
        i, f, g, o = jnp.split(gates, 4, axis=-1)
        c = jax.nn.sigmoid(f) * c + jax.nn.sigmoid(i) * jnp.tanh(g)
        h = jax.nn.sigmoid(o) * jnp.tanh(c)
        return h, c

    def step(carry, x_t):
        h1, c1, h2, c2 = carry
        h1, c1 = cell(x_t, h1, c1, w_ih0, w_hh0, b0)
        h2, c2 = cell(h1, h2, c2, w_ih1, w_hh1, b1)
        return (h1, c1, h2, c2), None

    init = tuple(jnp.zeros((batch, H), jnp.float32) for _ in range(4))
    (h1, c1, h2, c2), _ = jax.lax.scan(step, init, jnp.transpose(x, (1, 0, 2)))
    return h2 @ w_fc + b_fc


if __name__ == "__main__":
    key = jax.random.PRNGKey(0)
    k_x, k_p = jax.random.split(key)

    batch, seq = 2, 8
    x = jax.random.normal(k_x, (batch, seq, INPUT_SIZE), jnp.float32)
    params = init_params(k_p)

    out = jax.block_until_ready(stock_lstm_forward(x, params))

    expected = jax.block_until_ready(ref_forward(x, params))
    assert out.shape == (batch, OUTPUT)
    # bf16 recurrent matmuls (f32 accumulate/state) -> relaxed tolerance.
    assert jnp.allclose(out, expected, atol=2e-2, rtol=2e-2), (out, expected)

    print("KERNEL_OK")
</pallas_src>

<mosaic_0001>
module attributes {stable_mosaic.version = 11 : i64} {
  func.func @kernel(%arg0: i32, %arg1: memref<8x8x128xf32, #tpu.memory_space<vmem>>, %arg2: memref<32x128xbf16, #tpu.memory_space<vmem>>, %arg3: memref<32x128xbf16, #tpu.memory_space<vmem>>, %arg4: memref<32x128xbf16, #tpu.memory_space<vmem>>, %arg5: memref<1x128xf32, #tpu.memory_space<vmem>>, %arg6: memref<1x32xf32, #tpu.memory_space<vmem>>, %arg7: memref<1x1xf32, #tpu.memory_space<vmem>>, %arg8: memref<8x1xf32, #tpu.memory_space<vmem>>, %arg9: memref<8x32xf32, #tpu.memory_space<vmem>>, %arg10: memref<8x32xf32, #tpu.memory_space<vmem>>, %arg11: memref<8x32xf32, #tpu.memory_space<vmem>>, %arg12: memref<8x32xf32, #tpu.memory_space<vmem>>) attributes {dimension_semantics = [#tpu.dimension_semantics<arbitrary>], iteration_bounds = array<i64: 1>, scalar_prefetch = 0 : i64, scratch_operands = 4 : i64, tpu.core_type = #tpu.core_type<tc>, window_params = [{transform_indices = @transform_0, window_bounds = array<i64: 8, 8, 128>}, {pipeline_mode = #tpu.pipeline_mode<synchronous>, transform_indices = @transform_1, window_bounds = array<i64: 32, 128>}, {pipeline_mode = #tpu.pipeline_mode<synchronous>, transform_indices = @transform_2, window_bounds = array<i64: 32, 128>}, {pipeline_mode = #tpu.pipeline_mode<synchronous>, transform_indices = @transform_3, window_bounds = array<i64: 32, 128>}, {pipeline_mode = #tpu.pipeline_mode<synchronous>, transform_indices = @transform_4, window_bounds = array<i64: 1, 128>}, {pipeline_mode = #tpu.pipeline_mode<synchronous>, transform_indices = @transform_5, window_bounds = array<i64: 1, 32>}, {pipeline_mode = #tpu.pipeline_mode<synchronous>, transform_indices = @transform_6, window_bounds = array<i64: 1, 1>}, {pipeline_mode = #tpu.pipeline_mode<synchronous>, transform_indices = @transform_7, window_bounds = array<i64: 8, 1>}]} {
    %c0_i32 = arith.constant 0 : i32
    %0 = arith.cmpi eq, %arg0, %c0_i32 : i32
    %1 = arith.extui %0 : i1 to i32
    %c0_i32_0 = arith.constant 0 : i32
    %2 = arith.cmpi ne, %1, %c0_i32_0 : i32
    scf.if %2 {
      %cst_82 = arith.constant 0.000000e+00 : f32
      %348 = vector.broadcast %cst_82 : f32 to vector<8x32xf32>
      %c0_83 = arith.constant 0 : index
      %c0_84 = arith.constant 0 : index
      %349 = vector.load %arg9[%c0_83, %c0_84] : memref<8x32xf32, #tpu.memory_space<vmem>>, vector<8x32xf32>
      tpu.vector_store %arg9[%c0_83, %c0_84], %348 {strides = array<i32>} : memref<8x32xf32, #tpu.memory_space<vmem>>, vector<8x32xf32>,
      %cst_85 = arith.constant 0.000000e+00 : f32
      %350 = vector.broadcast %cst_85 : f32 to vector<8x32xf32>
      %c0_86 = arith.constant 0 : index
      %c0_87 = arith.constant 0 : index
      %351 = vector.load %arg10[%c0_86, %c0_87] : memref<8x32xf32, #tpu.memory_space<vmem>>, vector<8x32xf32>
      tpu.vector_store %arg10[%c0_86, %c0_87], %350 {strides = array<i32>} : memref<8x32xf32, #tpu.memory_space<vmem>>, vector<8x32xf32>,
      %cst_88 = arith.constant 0.000000e+00 : f32
      %352 = vector.broadcast %cst_88 : f32 to vector<8x32xf32>
      %c0_89 = arith.constant 0 : index
      %c0_90 = arith.constant 0 : index
      %353 = vector.load %arg11[%c0_89, %c0_90] : memref<8x32xf32, #tpu.memory_space<vmem>>, vector<8x32xf32>
      tpu.vector_store %arg11[%c0_89, %c0_90], %352 {strides = array<i32>} : memref<8x32xf32, #tpu.memory_space<vmem>>, vector<8x32xf32>,
      %cst_91 = arith.constant 0.000000e+00 : f32
      %354 = vector.broadcast %cst_91 : f32 to vector<8x32xf32>
      %c0_92 = arith.constant 0 : index
      %c0_93 = arith.constant 0 : index
      %355 = vector.load %arg12[%c0_92, %c0_93] : memref<8x32xf32, #tpu.memory_space<vmem>>, vector<8x32xf32>
      tpu.vector_store %arg12[%c0_92, %c0_93], %354 {strides = array<i32>} : memref<8x32xf32, #tpu.memory_space<vmem>>, vector<8x32xf32>,
    } else {
    }
    %c0 = arith.constant 0 : index
    %c0_1 = arith.constant 0 : index
    %3 = vector.load %arg9[%c0, %c0_1] : memref<8x32xf32, #tpu.memory_space<vmem>>, vector<8x32xf32>
    %c0_2 = arith.constant 0 : index
    %c0_3 = arith.constant 0 : index
    %4 = vector.load %arg10[%c0_2, %c0_3] : memref<8x32xf32, #tpu.memory_space<vmem>>, vector<8x32xf32>
    %c0_4 = arith.constant 0 : index
    %c0_5 = arith.constant 0 : index
    %5 = vector.load %arg11[%c0_4, %c0_5] : memref<8x32xf32, #tpu.memory_space<vmem>>, vector<8x32xf32>
    %c0_6 = arith.constant 0 : index
    %c0_7 = arith.constant 0 : index
    %6 = vector.load %arg12[%c0_6, %c0_7] : memref<8x32xf32, #tpu.memory_space<vmem>>, vector<8x32xf32>
    %c0_8 = arith.constant 0 : index
    %c0_9 = arith.constant 0 : index
    %7 = vector.load %arg2[%c0_8, %c0_9] : memref<32x128xbf16, #tpu.memory_space<vmem>>, vector<32x128xbf16>
    %c0_10 = arith.constant 0 : index
    %c0_11 = arith.constant 0 : index
    %8 = vector.load %arg3[%c0_10, %c0_11] : memref<32x128xbf16, #tpu.memory_space<vmem>>, vector<32x128xbf16>
    %c0_12 = arith.constant 0 : index
    %c0_13 = arith.constant 0 : index
    %9 = vector.load %arg4[%c0_12, %c0_13] : memref<32x128xbf16, #tpu.memory_space<vmem>>, vector<32x128xbf16>
    %c0_14 = arith.constant 0 : index
    %c0_15 = arith.constant 0 : index
    %10 = vector.load %arg5[%c0_14, %c0_15] : memref<1x128xf32, #tpu.memory_space<vmem>>, vector<1x128xf32>
    %11 = vector.shape_cast %10 : vector<1x128xf32> to vector<1x128xf32>
    %12 = vector.broadcast %11 : vector<1x128xf32> to vector<8x128xf32>
    %13 = arith.truncf %5 : vector<8x32xf32> to vector<8x32xbf16>
    %cst = arith.constant dense<0.000000e+00> : vector<8x128xf32>
    %14 = tpu.matmul %13, %9, %cst {dimension_numbers = #tpu.dot_dimension_numbers<[1], [0], [0], [1], [0, 0, 1, 1], [], []>} : vector<8x32xbf16>, vector<32x128xbf16>, vector<8x128xf32> -> vector<8x128xf32>
    %15 = arith.addf %14, %12 : vector<8x128xf32>
    %c0_16 = arith.constant 0 : index
    %c0_17 = arith.constant 0 : index
    %c0_18 = arith.constant 0 : index
    %16 = vector.load %arg1[%c0_16, %c0_17, %c0_18] : memref<8x8x128xf32, #tpu.memory_space<vmem>>, vector<1x8x128xf32>
    %17 = vector.shape_cast %16 : vector<1x8x128xf32> to vector<8x128xf32>
    %18 = arith.truncf %3 : vector<8x32xf32> to vector<8x32xbf16>
    %cst_19 = arith.constant dense<0.000000e+00> : vector<8x128xf32>
    %19 = tpu.matmul %18, %7, %cst_19 {dimension_numbers = #tpu.dot_dimension_numbers<[1], [0], [0], [1], [0, 0, 1, 1], [], []>} : vector<8x32xbf16>, vector<32x128xbf16>, vector<8x128xf32> -> vector<8x128xf32>
    %20 = arith.addf %17, %19 : vector<8x128xf32>
    %21 = arith.negf %20 : vector<8x128xf32>
    %22 = math.exp %21 : vector<8x128xf32>
    %cst_20 = arith.constant 1.000000e+00 : f32
    %23 = vector.broadcast %cst_20 : f32 to vector<8x128xf32>
    %24 = arith.addf %23, %22 : vector<8x128xf32>
    %25 = arith.divf %23, %24 : vector<8x128xf32>
    %26 = vector.extract_strided_slice %25 {offsets = [0, 0], sizes = [8, 32], strides = [1, 1]} : vector<8x128xf32> to vector<8x32xf32>
    %27 = vector.extract_strided_slice %25 {offsets = [0, 32], sizes = [8, 32], strides = [1, 1]} : vector<8x128xf32> to vector<8x32xf32>
    %28 = vector.extract_strided_slice %25 {offsets = [0, 96], sizes = [8, 32], strides = [1, 1]} : vector<8x128xf32> to vector<8x32xf32>
    %29 = vector.extract_strided_slice %20 {offsets = [0, 64], sizes = [8, 32], strides = [1, 1]} : vector<8x128xf32> to vector<8x32xf32>
    %30 = math.tanh %29 : vector<8x32xf32>
    %31 = arith.mulf %27, %4 : vector<8x32xf32>
    %32 = arith.mulf %26, %30 : vector<8x32xf32>
    %33 = arith.addf %31, %32 : vector<8x32xf32>
    %34 = math.tanh %33 : vector<8x32xf32>
    %35 = arith.mulf %28, %34 : vector<8x32xf32>
    %36 = arith.truncf %35 : vector<8x32xf32> to vector<8x32xbf16>
    %cst_21 = arith.constant dense<0.000000e+00> : vector<8x128xf32>
    %37 = tpu.matmul %36, %8, %cst_21 {dimension_numbers = #tpu.dot_dimension_numbers<[1], [0], [0], [1], [0, 0, 1, 1], [], []>} : vector<8x32xbf16>, vector<32x128xbf16>, vector<8x128xf32> -> vector<8x128xf32>
    %38 = arith.addf %15, %37 : vector<8x128xf32>
    %39 = arith.negf %38 : vector<8x128xf32>
    %40 = math.exp %39 : vector<8x128xf32>
    %cst_22 = arith.constant 1.000000e+00 : f32
    %41 = vector.broadcast %cst_22 : f32 to vector<8x128xf32>
    %42 = arith.addf %41, %40 : vector<8x128xf32>
    %43 = arith.divf %41, %42 : vector<8x128xf32>
    %44 = vector.extract_strided_slice %43 {offsets = [0, 0], sizes = [8, 32], strides = [1, 1]} : vector<8x128xf32> to vector<8x32xf32>
    %45 = vector.extract_strided_slice %43 {offsets = [0, 32], sizes = [8, 32], strides = [1, 1]} : vector<8x128xf32> to vector<8x32xf32>
    %46 = vector.extract_strided_slice %43 {offsets = [0, 96], sizes = [8, 32], strides = [1, 1]} : vector<8x128xf32> to vector<8x32xf32>
    %47 = vector.extract_strided_slice %38 {offsets = [0, 64], sizes = [8, 32], strides = [1, 1]} : vector<8x128xf32> to vector<8x32xf32>
    %48 = math.tanh %47 : vector<8x32xf32>
    %49 = arith.mulf %45, %6 : vector<8x32xf32>
    %50 = arith.mulf %44, %48 : vector<8x32xf32>
    %51 = arith.addf %49, %50 : vector<8x32xf32>
    %52 = math.tanh %51 : vector<8x32xf32>
    %53 = arith.mulf %46, %52 : vector<8x32xf32>
    %54 = arith.truncf %53 : vector<8x32xf32> to vector<8x32xbf16>
    %cst_23 = arith.constant dense<0.000000e+00> : vector<8x128xf32>
    %55 = tpu.matmul %54, %9, %cst_23 {dimension_numbers = #tpu.dot_dimension_numbers<[1], [0], [0], [1], [0, 0, 1, 1], [], []>} : vector<8x32xbf16>, vector<32x128xbf16>, vector<8x128xf32> -> vector<8x128xf32>
    %56 = arith.addf %55, %12 : vector<8x128xf32>
    %c1 = arith.constant 1 : index
    %c0_24 = arith.constant 0 : index
    %c0_25 = arith.constant 0 : index
    %57 = vector.load %arg1[%c1, %c0_24, %c0_25] : memref<8x8x128xf32, #tpu.memory_space<vmem>>, vector<1x8x128xf32>
    %58 = vector.shape_cast %57 : vector<1x8x128xf32> to vector<8x128xf32>
    %59 = arith.truncf %35 : vector<8x32xf32> to vector<8x32xbf16>
    %cst_26 = arith.constant dense<0.000000e+00> : vector<8x128xf32>
    %60 = tpu.matmul %59, %7, %cst_26 {dimension_numbers = #tpu.dot_dimension_numbers<[1], [0], [0], [1], [0, 0, 1, 1], [], []>} : vector<8x32xbf16>, vector<32x128xbf16>, vector<8x128xf32> -> vector<8x128xf32>
    %61 = arith.addf %58, %60 : vector<8x128xf32>
    %62 = arith.negf %61 : vector<8x128xf32>
    %63 = math.exp %62 : vector<8x128xf32>
    %cst_27 = arith.constant 1.000000e+00 : f32
    %64 = vector.broadcast %cst_27 : f32 to vector<8x128xf32>
    %65 = arith.addf %64, %63 : vector<8x128xf32>
    %66 = arith.divf %64, %65 : vector<8x128xf32>
    %67 = vector.extract_strided_slice %66 {offsets = [0, 0], sizes = [8, 32], strides = [1, 1]} : vector<8x128xf32> to vector<8x32xf32>
    %68 = vector.extract_strided_slice %66 {offsets = [0, 32], sizes = [8, 32], strides = [1, 1]} : vector<8x128xf32> to vector<8x32xf32>
    %69 = vector.extract_strided_slice %66 {offsets = [0, 96], sizes = [8, 32], strides = [1, 1]} : vector<8x128xf32> to vector<8x32xf32>
    %70 = vector.extract_strided_slice %61 {offsets = [0, 64], sizes = [8, 32], strides = [1, 1]} : vector<8x128xf32> to vector<8x32xf32>
    %71 = math.tanh %70 : vector<8x32xf32>
    %72 = arith.mulf %68, %33 : vector<8x32xf32>
    %73 = arith.mulf %67, %71 : vector<8x32xf32>
    %74 = arith.addf %72, %73 : vector<8x32xf32>
    %75 = math.tanh %74 : vector<8x32xf32>
    %76 = arith.mulf %69, %75 : vector<8x32xf32>
    %77 = arith.truncf %76 : vector<8x32xf32> to vector<8x32xbf16>
    %cst_28 = arith.constant dense<0.000000e+00> : vector<8x128xf32>
    %78 = tpu.matmul %77, %8, %cst_28 {dimension_numbers = #tpu.dot_dimension_numbers<[1], [0], [0], [1], [0, 0, 1, 1], [], []>} : vector<8x32xbf16>, vector<32x128xbf16>, vector<8x128xf32> -> vector<8x128xf32>
    %79 = arith.addf %56, %78 : vector<8x128xf32>
    %80 = arith.negf %79 : vector<8x128xf32>
    %81 = math.exp %80 : vector<8x128xf32>
    %cst_29 = arith.constant 1.000000e+00 : f32
    %82 = vector.broadcast %cst_29 : f32 to vector<8x128xf32>
    %83 = arith.addf %82, %81 : vector<8x128xf32>
    %84 = arith.divf %82, %83 : vector<8x128xf32>
    %85 = vector.extract_strided_slice %84 {offsets = [0, 0], sizes = [8, 32], strides = [1, 1]} : vector<8x128xf32> to vector<8x32xf32>
    %86 = vector.extract_strided_slice %84 {offsets = [0, 32], sizes = [8, 32], strides = [1, 1]} : vector<8x128xf32> to vector<8x32xf32>
    %87 = vector.extract_strided_slice %84 {offsets = [0, 96], sizes = [8, 32], strides = [1, 1]} : vector<8x128xf32> to vector<8x32xf32>
    %88 = vector.extract_strided_slice %79 {offsets = [0, 64], sizes = [8, 32], strides = [1, 1]} : vector<8x128xf32> to vector<8x32xf32>
    %89 = math.tanh %88 : vector<8x32xf32>
    %90 = arith.mulf %86, %51 : vector<8x32xf32>
    %91 = arith.mulf %85, %89 : vector<8x32xf32>
    %92 = arith.addf %90, %91 : vector<8x32xf32>
    %93 = math.tanh %92 : vector<8x32xf32>
    %94 = arith.mulf %87, %93 : vector<8x32xf32>
    %95 = arith.truncf %94 : vector<8x32xf32> to vector<8x32xbf16>
    %cst_30 = arith.constant dense<0.000000e+00> : vector<8x128xf32>
    %96 = tpu.matmul %95, %9, %cst_30 {dimension_numbers = #tpu.dot_dimension_numbers<[1], [0], [0], [1], [0, 0, 1, 1], [], []>} : vector<8x32xbf16>, vector<32x128xbf16>, vector<8x128xf32> -> vector<8x128xf32>
    %97 = arith.addf %96, %12 : vector<8x128xf32>
    %c2 = arith.constant 2 : index
    %c0_31 = arith.constant 0 : index
    %c0_32 = arith.constant 0 : index
    %98 = vector.load %arg1[%c2, %c0_31, %c0_32] : memref<8x8x128xf32, #tpu.memory_space<vmem>>, vector<1x8x128xf32>
    %99 = vector.shape_cast %98 : vector<1x8x128xf32> to vector<8x128xf32>
    %100 = arith.truncf %76 : vector<8x32xf32> to vector<8x32xbf16>
    %cst_33 = arith.constant dense<0.000000e+00> : vector<8x128xf32>
    %101 = tpu.matmul %100, %7, %cst_33 {dimension_numbers = #tpu.dot_dimension_numbers<[1], [0], [0], [1], [0, 0, 1, 1], [], []>} : vector<8x32xbf16>, vector<32x128xbf16>, vector<8x128xf32> -> vector<8x128xf32>
    %102 = arith.addf %99, %101 : vector<8x128xf32>
    %103 = arith.negf %102 : vector<8x128xf32>
    %104 = math.exp %103 : vector<8x128xf32>
    %cst_34 = arith.constant 1.000000e+00 : f32
    %105 = vector.broadcast %cst_34 : f32 to vector<8x128xf32>
    %106 = arith.addf %105, %104 : vector<8x128xf32>
    %107 = arith.divf %105, %106 : vector<8x128xf32>
    %108 = vector.extract_strided_slice %107 {offsets = [0, 0], sizes = [8, 32], strides = [1, 1]} : vector<8x128xf32> to vector<8x32xf32>
    %109 = vector.extract_strided_slice %107 {offsets = [0, 32], sizes = [8, 32], strides = [1, 1]} : vector<8x128xf32> to vector<8x32xf32>
    %110 = vector.extract_strided_slice %107 {offsets = [0, 96], sizes = [8, 32], strides = [1, 1]} : vector<8x128xf32> to vector<8x32xf32>
    %111 = vector.extract_strided_slice %102 {offsets = [0, 64], sizes = [8, 32], strides = [1, 1]} : vector<8x128xf32> to vector<8x32xf32>
    %112 = math.tanh %111 : vector<8x32xf32>
    %113 = arith.mulf %109, %74 : vector<8x32xf32>
    %114 = arith.mulf %108, %112 : vector<8x32xf32>
    %115 = arith.addf %113, %114 : vector<8x32xf32>
    %116 = math.tanh %115 : vector<8x32xf32>
    %117 = arith.mulf %110, %116 : vector<8x32xf32>
    %118 = arith.truncf %117 : vector<8x32xf32> to vector<8x32xbf16>
    %cst_35 = arith.constant dense<0.000000e+00> : vector<8x128xf32>
    %119 = tpu.matmul %118, %8, %cst_35 {dimension_numbers = #tpu.dot_dimension_numbers<[1], [0], [0], [1], [0, 0, 1, 1], [], []>} : vector<8x32xbf16>, vector<32x128xbf16>, vector<8x128xf32> -> vector<8x128xf32>
    %120 = arith.addf %97, %119 : vector<8x128xf32>
    %121 = arith.negf %120 : vector<8x128xf32>
    %122 = math.exp %121 : vector<8x128xf32>
    %cst_36 = arith.constant 1.000000e+00 : f32
    %123 = vector.broadcast %cst_36 : f32 to vector<8x128xf32>
    %124 = arith.addf %123, %122 : vector<8x128xf32>
    %125 = arith.divf %123, %124 : vector<8x128xf32>
    %126 = vector.extract_strided_slice %125 {offsets = [0, 0], sizes = [8, 32], strides = [1, 1]} : vector<8x128xf32> to vector<8x32xf32>
    %127 = vector.extract_strided_slice %125 {offsets = [0, 32], sizes = [8, 32], strides = [1, 1]} : vector<8x128xf32> to vector<8x32xf32>
    %128 = vector.extract_strided_slice %125 {offsets = [0, 96], sizes = [8, 32], strides = [1, 1]} : vector<8x128xf32> to vector<8x32xf32>
    %129 = vector.extract_strided_slice %120 {offsets = [0, 64], sizes = [8, 32], strides = [1, 1]} : vector<8x128xf32> to vector<8x32xf32>
    %130 = math.tanh %129 : vector<8x32xf32>
    %131 = arith.mulf %127, %92 : vector<8x32xf32>
    %132 = arith.mulf %126, %130 : vector<8x32xf32>
    %133 = arith.addf %131, %132 : vector<8x32xf32>
    %134 = math.tanh %133 : vector<8x32xf32>
    %135 = arith.mulf %128, %134 : vector<8x32xf32>
    %136 = arith.truncf %135 : vector<8x32xf32> to vector<8x32xbf16>
    %cst_37 = arith.constant dense<0.000000e+00> : vector<8x128xf32>
    %137 = tpu.matmul %136, %9, %cst_37 {dimension_numbers = #tpu.dot_dimension_numbers<[1], [0], [0], [1], [0, 0, 1, 1], [], []>} : vector<8x32xbf16>, vector<32x128xbf16>, vector<8x128xf32> -> vector<8x128xf32>
    %138 = arith.addf %137, %12 : vector<8x128xf32>
    %c3 = arith.constant 3 : index
    %c0_38 = arith.constant 0 : index
    %c0_39 = arith.constant 0 : index
    %139 = vector.load %arg1[%c3, %c0_38, %c0_39] : memref<8x8x128xf32, #tpu.memory_space<vmem>>, vector<1x8x128xf32>
    %140 = vector.shape_cast %139 : vector<1x8x128xf32> to vector<8x128xf32>
    %141 = arith.truncf %117 : vector<8x32xf32> to vector<8x32xbf16>
    %cst_40 = arith.constant dense<0.000000e+00> : vector<8x128xf32>
    %142 = tpu.matmul %141, %7, %cst_40 {dimension_numbers = #tpu.dot_dimension_numbers<[1], [0], [0], [1], [0, 0, 1, 1], [], []>} : vector<8x32xbf16>, vector<32x128xbf16>, vector<8x128xf32> -> vector<8x128xf32>
    %143 = arith.addf %140, %142 : vector<8x128xf32>
    %144 = arith.negf %143 : vector<8x128xf32>
    %145 = math.exp %144 : vector<8x128xf32>
    %cst_41 = arith.constant 1.000000e+00 : f32
    %146 = vector.broadcast %cst_41 : f32 to vector<8x128xf32>
    %147 = arith.addf %146, %145 : vector<8x128xf32>
    %148 = arith.divf %146, %147 : vector<8x128xf32>
    %149 = vector.extract_strided_slice %148 {offsets = [0, 0], sizes = [8, 32], strides = [1, 1]} : vector<8x128xf32> to vector<8x32xf32>
    %150 = vector.extract_strided_slice %148 {offsets = [0, 32], sizes = [8, 32], strides = [1, 1]} : vector<8x128xf32> to vector<8x32xf32>
    %151 = vector.extract_strided_slice %148 {offsets = [0, 96], sizes = [8, 32], strides = [1, 1]} : vector<8x128xf32> to vector<8x32xf32>
    %152 = vector.extract_strided_slice %143 {offsets = [0, 64], sizes = [8, 32], strides = [1, 1]} : vector<8x128xf32> to vector<8x32xf32>
    %153 = math.tanh %152 : vector<8x32xf32>
    %154 = arith.mulf %150, %115 : vector<8x32xf32>
    %155 = arith.mulf %149, %153 : vector<8x32xf32>
    %156 = arith.addf %154, %155 : vector<8x32xf32>
    %157 = math.tanh %156 : vector<8x32xf32>
    %158 = arith.mulf %151, %157 : vector<8x32xf32>
    %159 = arith.truncf %158 : vector<8x32xf32> to vector<8x32xbf16>
    %cst_42 = arith.constant dense<0.000000e+00> : vector<8x128xf32>
    %160 = tpu.matmul %159, %8, %cst_42 {dimension_numbers = #tpu.dot_dimension_numbers<[1], [0], [0], [1], [0, 0, 1, 1], [], []>} : vector<8x32xbf16>, vector<32x128xbf16>, vector<8x128xf32> -> vector<8x128xf32>
    %161 = arith.addf %138, %160 : vector<8x128xf32>
    %162 = arith.negf %161 : vector<8x128xf32>
    %163 = math.exp %162 : vector<8x128xf32>
    %cst_43 = arith.constant 1.000000e+00 : f32
    %164 = vector.broadcast %cst_43 : f32 to vector<8x128xf32>
    %165 = arith.addf %164, %163 : vector<8x128xf32>
    %166 = arith.divf %164, %165 : vector<8x128xf32>
    %167 = vector.extract_strided_slice %166 {offsets = [0, 0], sizes = [8, 32], strides = [1, 1]} : vector<8x128xf32> to vector<8x32xf32>
    %168 = vector.extract_strided_slice %166 {offsets = [0, 32], sizes = [8, 32], strides = [1, 1]} : vector<8x128xf32> to vector<8x32xf32>
    %169 = vector.extract_strided_slice %166 {offsets = [0, 96], sizes = [8, 32], strides = [1, 1]} : vector<8x128xf32> to vector<8x32xf32>
    %170 = vector.extract_strided_slice %161 {offsets = [0, 64], sizes = [8, 32], strides = [1, 1]} : vector<8x128xf32> to vector<8x32xf32>
    %171 = math.tanh %170 : vector<8x32xf32>
    %172 = arith.mulf %168, %133 : vector<8x32xf32>
    %173 = arith.mulf %167, %171 : vector<8x32xf32>
    %174 = arith.addf %172, %173 : vector<8x32xf32>
    %175 = math.tanh %174 : vector<8x32xf32>
    %176 = arith.mulf %169, %175 : vector<8x32xf32>
    %177 = arith.truncf %176 : vector<8x32xf32> to vector<8x32xbf16>
    %cst_44 = arith.constant dense<0.000000e+00> : vector<8x128xf32>
    %178 = tpu.matmul %177, %9, %cst_44 {dimension_numbers = #tpu.dot_dimension_numbers<[1], [0], [0], [1], [0, 0, 1, 1], [], []>} : vector<8x32xbf16>, vector<32x128xbf16>, vector<8x128xf32> -> vector<8x128xf32>
    %179 = arith.addf %178, %12 : vector<8x128xf32>
    %c4 = arith.constant 4 : index
    %c0_45 = arith.constant 0 : index
    %c0_46 = arith.constant 0 : index
    %180 = vector.load %arg1[%c4, %c0_45, %c0_46] : memref<8x8x128xf32, #tpu.memory_space<vmem>>, vector<1x8x128xf32>
    %181 = vector.shape_cast %180 : vector<1x8x128xf32> to vector<8x128xf32>
    %182 = arith.truncf %158 : vector<8x32xf32> to vector<8x32xbf16>
    %cst_47 = arith.constant dense<0.000000e+00> : vector<8x128xf32>
    %183 = tpu.matmul %182, %7, %cst_47 {dimension_numbers = #tpu.dot_dimension_numbers<[1], [0], [0], [1], [0, 0, 1, 1], [], []>} : vector<8x32xbf16>, vector<32x128xbf16>, vector<8x128xf32> -> vector<8x128xf32>
    %184 = arith.addf %181, %183 : vector<8x128xf32>
    %185 = arith.negf %184 : vector<8x128xf32>
    %186 = math.exp %185 : vector<8x128xf32>
    %cst_48 = arith.constant 1.000000e+00 : f32
    %187 = vector.broadcast %cst_48 : f32 to vector<8x128xf32>
    %188 = arith.addf %187, %186 : vector<8x128xf32>
    %189 = arith.divf %187, %188 : vector<8x128xf32>
    %190 = vector.extract_strided_slice %189 {offsets = [0, 0], sizes = [8, 32], strides = [1, 1]} : vector<8x128xf32> to vector<8x32xf32>
    %191 = vector.extract_strided_slice %189 {offsets = [0, 32], sizes = [8, 32], strides = [1, 1]} : vector<8x128xf32> to vector<8x32xf32>
    %192 = vector.extract_strided_slice %189 {offsets = [0, 96], sizes = [8, 32], strides = [1, 1]} : vector<8x128xf32> to vector<8x32xf32>
    %193 = vector.extract_strided_slice %184 {offsets = [0, 64], sizes = [8, 32], strides = [1, 1]} : vector<8x128xf32> to vector<8x32xf32>
    %194 = math.tanh %193 : vector<8x32xf32>
    %195 = arith.mulf %191, %156 : vector<8x32xf32>
    %196 = arith.mulf %190, %194 : vector<8x32xf32>
    %197 = arith.addf %195, %196 : vector<8x32xf32>
    %198 = math.tanh %197 : vector<8x32xf32>
    %199 = arith.mulf %192, %198 : vector<8x32xf32>
    %200 = arith.truncf %199 : vector<8x32xf32> to vector<8x32xbf16>
    %cst_49 = arith.constant dense<0.000000e+00> : vector<8x128xf32>
    %201 = tpu.matmul %200, %8, %cst_49 {dimension_numbers = #tpu.dot_dimension_numbers<[1], [0], [0], [1], [0, 0, 1, 1], [], []>} : vector<8x32xbf16>, vector<32x128xbf16>, vector<8x128xf32> -> vector<8x128xf32>
    %202 = arith.addf %179, %201 : vector<8x128xf32>
    %203 = arith.negf %202 : vector<8x128xf32>
    %204 = math.exp %203 : vector<8x128xf32>
    %cst_50 = arith.constant 1.000000e+00 : f32
    %205 = vector.broadcast %cst_50 : f32 to vector<8x128xf32>
    %206 = arith.addf %205, %204 : vector<8x128xf32>
    %207 = arith.divf %205, %206 : vector<8x128xf32>
    %208 = vector.extract_strided_slice %207 {offsets = [0, 0], sizes = [8, 32], strides = [1, 1]} : vector<8x128xf32> to vector<8x32xf32>
    %209 = vector.extract_strided_slice %207 {offsets = [0, 32], sizes = [8, 32], strides = [1, 1]} : vector<8x128xf32> to vector<8x32xf32>
    %210 = vector.extract_strided_slice %207 {offsets = [0, 96], sizes = [8, 32], strides = [1, 1]} : vector<8x128xf32> to vector<8x32xf32>
    %211 = vector.extract_strided_slice %202 {offsets = [0, 64], sizes = [8, 32], strides = [1, 1]} : vector<8x128xf32> to vector<8x32xf32>
    %212 = math.tanh %211 : vector<8x32xf32>
    %213 = arith.mulf %209, %174 : vector<8x32xf32>
    %214 = arith.mulf %208, %212 : vector<8x32xf32>
    %215 = arith.addf %213, %214 : vector<8x32xf32>
    %216 = math.tanh %215 : vector<8x32xf32>
    %217 = arith.mulf %210, %216 : vector<8x32xf32>
    %218 = arith.truncf %217 : vector<8x32xf32> to vector<8x32xbf16>
    %cst_51 = arith.constant dense<0.000000e+00> : vector<8x128xf32>
    %219 = tpu.matmul %218, %9, %cst_51 {dimension_numbers = #tpu.dot_dimension_numbers<[1], [0], [0], [1], [0, 0, 1, 1], [], []>} : vector<8x32xbf16>, vector<32x128xbf16>, vector<8x128xf32> -> vector<8x128xf32>
    %220 = arith.addf %219, %12 : vector<8x128xf32>
    %c5 = arith.constant 5 : index
    %c0_52 = arith.constant 0 : index
    %c0_53 = arith.constant 0 : index
    %221 = vector.load %arg1[%c5, %c0_52, %c0_53] : memref<8x8x128xf32, #tpu.memory_space<vmem>>, vector<1x8x128xf32>
    %222 = vector.shape_cast %221 : vector<1x8x128xf32> to vector<8x128xf32>
    %223 = arith.truncf %199 : vector<8x32xf32> to vector<8x32xbf16>
    %cst_54 = arith.constant dense<0.000000e+00> : vector<8x128xf32>
    %224 = tpu.matmul %223, %7, %cst_54 {dimension_numbers = #tpu.dot_dimension_numbers<[1], [0], [0], [1], [0, 0, 1, 1], [], []>} : vector<8x32xbf16>, vector<32x128xbf16>, vector<8x128xf32> -> vector<8x128xf32>
    %225 = arith.addf %222, %224 : vector<8x128xf32>
    %226 = arith.negf %225 : vector<8x128xf32>
    %227 = math.exp %226 : vector<8x128xf32>
    %cst_55 = arith.constant 1.000000e+00 : f32
    %228 = vector.broadcast %cst_55 : f32 to vector<8x128xf32>
    %229 = arith.addf %228, %227 : vector<8x128xf32>
    %230 = arith.divf %228, %229 : vector<8x128xf32>
    %231 = vector.extract_strided_slice %230 {offsets = [0, 0], sizes = [8, 32], strides = [1, 1]} : vector<8x128xf32> to vector<8x32xf32>
    %232 = vector.extract_strided_slice %230 {offsets = [0, 32], sizes = [8, 32], strides = [1, 1]} : vector<8x128xf32> to vector<8x32xf32>
    %233 = vector.extract_strided_slice %230 {offsets = [0, 96], sizes = [8, 32], strides = [1, 1]} : vector<8x128xf32> to vector<8x32xf32>
    %234 = vector.extract_strided_slice %225 {offsets = [0, 64], sizes = [8, 32], strides = [1, 1]} : vector<8x128xf32> to vector<8x32xf32>
    %235 = math.tanh %234 : vector<8x32xf32>
    %236 = arith.mulf %232, %197 : vector<8x32xf32>
    %237 = arith.mulf %231, %235 : vector<8x32xf32>
    %238 = arith.addf %236, %237 : vector<8x32xf32>
    %239 = math.tanh %238 : vector<8x32xf32>
    %240 = arith.mulf %233, %239 : vector<8x32xf32>
    %241 = arith.truncf %240 : vector<8x32xf32> to vector<8x32xbf16>
    %cst_56 = arith.constant dense<0.000000e+00> : vector<8x128xf32>
    %242 = tpu.matmul %241, %8, %cst_56 {dimension_numbers = #tpu.dot_dimension_numbers<[1], [0], [0], [1], [0, 0, 1, 1], [], []>} : vector<8x32xbf16>, vector<32x128xbf16>, vector<8x128xf32> -> vector<8x128xf32>
    %243 = arith.addf %220, %242 : vector<8x128xf32>
    %244 = arith.negf %243 : vector<8x128xf32>
    %245 = math.exp %244 : vector<8x128xf32>
    %cst_57 = arith.constant 1.000000e+00 : f32
    %246 = vector.broadcast %cst_57 : f32 to vector<8x128xf32>
    %247 = arith.addf %246, %245 : vector<8x128xf32>
    %248 = arith.divf %246, %247 : vector<8x128xf32>
    %249 = vector.extract_strided_slice %248 {offsets = [0, 0], sizes = [8, 32], strides = [1, 1]} : vector<8x128xf32> to vector<8x32xf32>
    %250 = vector.extract_strided_slice %248 {offsets = [0, 32], sizes = [8, 32], strides = [1, 1]} : vector<8x128xf32> to vector<8x32xf32>
    %251 = vector.extract_strided_slice %248 {offsets = [0, 96], sizes = [8, 32], strides = [1, 1]} : vector<8x128xf32> to vector<8x32xf32>
    %252 = vector.extract_strided_slice %243 {offsets = [0, 64], sizes = [8, 32], strides = [1, 1]} : vector<8x128xf32> to vector<8x32xf32>
    %253 = math.tanh %252 : vector<8x32xf32>
    %254 = arith.mulf %250, %215 : vector<8x32xf32>
    %255 = arith.mulf %249, %253 : vector<8x32xf32>
    %256 = arith.addf %254, %255 : vector<8x32xf32>
    %257 = math.tanh %256 : vector<8x32xf32>
    %258 = arith.mulf %251, %257 : vector<8x32xf32>
    %259 = arith.truncf %258 : vector<8x32xf32> to vector<8x32xbf16>
    %cst_58 = arith.constant dense<0.000000e+00> : vector<8x128xf32>
    %260 = tpu.matmul %259, %9, %cst_58 {dimension_numbers = #tpu.dot_dimension_numbers<[1], [0], [0], [1], [0, 0, 1, 1], [], []>} : vector<8x32xbf16>, vector<32x128xbf16>, vector<8x128xf32> -> vector<8x128xf32>
    %261 = arith.addf %260, %12 : vector<8x128xf32>
    %c6 = arith.constant 6 : index
    %c0_59 = arith.constant 0 : index
    %c0_60 = arith.constant 0 : index
    %262 = vector.load %arg1[%c6, %c0_59, %c0_60] : memref<8x8x128xf32, #tpu.memory_space<vmem>>, vector<1x8x128xf32>
    %263 = vector.shape_cast %262 : vector<1x8x128xf32> to vector<8x128xf32>
    %264 = arith.truncf %240 : vector<8x32xf32> to vector<8x32xbf16>
    %cst_61 = arith.constant dense<0.000000e+00> : vector<8x128xf32>
    %265 = tpu.matmul %264, %7, %cst_61 {dimension_numbers = #tpu.dot_dimension_numbers<[1], [0], [0], [1], [0, 0, 1, 1], [], []>} : vector<8x32xbf16>, vector<32x128xbf16>, vector<8x128xf32> -> vector<8x128xf32>
    %266 = arith.addf %263, %265 : vector<8x128xf32>
    %267 = arith.negf %266 : vector<8x128xf32>
    %268 = math.exp %267 : vector<8x128xf32>
    %cst_62 = arith.constant 1.000000e+00 : f32
    %269 = vector.broadcast %cst_62 : f32 to vector<8x128xf32>
    %270 = arith.addf %269, %268 : vector<8x128xf32>
    %271 = arith.divf %269, %270 : vector<8x128xf32>
    %272 = vector.extract_strided_slice %271 {offsets = [0, 0], sizes = [8, 32], strides = [1, 1]} : vector<8x128xf32> to vector<8x32xf32>
    %273 = vector.extract_strided_slice %271 {offsets = [0, 32], sizes = [8, 32], strides = [1, 1]} : vector<8x128xf32> to vector<8x32xf32>
    %274 = vector.extract_strided_slice %271 {offsets = [0, 96], sizes = [8, 32], strides = [1, 1]} : vector<8x128xf32> to vector<8x32xf32>
    %275 = vector.extract_strided_slice %266 {offsets = [0, 64], sizes = [8, 32], strides = [1, 1]} : vector<8x128xf32> to vector<8x32xf32>
    %276 = math.tanh %275 : vector<8x32xf32>
    %277 = arith.mulf %273, %238 : vector<8x32xf32>
    %278 = arith.mulf %272, %276 : vector<8x32xf32>
    %279 = arith.addf %277, %278 : vector<8x32xf32>
    %280 = math.tanh %279 : vector<8x32xf32>
    %281 = arith.mulf %274, %280 : vector<8x32xf32>
    %282 = arith.truncf %281 : vector<8x32xf32> to vector<8x32xbf16>
    %cst_63 = arith.constant dense<0.000000e+00> : vector<8x128xf32>
    %283 = tpu.matmul %282, %8, %cst_63 {dimension_numbers = #tpu.dot_dimension_numbers<[1], [0], [0], [1], [0, 0, 1, 1], [], []>} : vector<8x32xbf16>, vector<32x128xbf16>, vector<8x128xf32> -> vector<8x128xf32>
    %284 = arith.addf %261, %283 : vector<8x128xf32>
    %285 = arith.negf %284 : vector<8x128xf32>
    %286 = math.exp %285 : vector<8x128xf32>
    %cst_64 = arith.constant 1.000000e+00 : f32
    %287 = vector.broadcast %cst_64 : f32 to vector<8x128xf32>
    %288 = arith.addf %287, %286 : vector<8x128xf32>
    %289 = arith.divf %287, %288 : vector<8x128xf32>
    %290 = vector.extract_strided_slice %289 {offsets = [0, 0], sizes = [8, 32], strides = [1, 1]} : vector<8x128xf32> to vector<8x32xf32>
    %291 = vector.extract_strided_slice %289 {offsets = [0, 32], sizes = [8, 32], strides = [1, 1]} : vector<8x128xf32> to vector<8x32xf32>
    %292 = vector.extract_strided_slice %289 {offsets = [0, 96], sizes = [8, 32], strides = [1, 1]} : vector<8x128xf32> to vector<8x32xf32>
    %293 = vector.extract_strided_slice %284 {offsets = [0, 64], sizes = [8, 32], strides = [1, 1]} : vector<8x128xf32> to vector<8x32xf32>
    %294 = math.tanh %293 : vector<8x32xf32>
    %295 = arith.mulf %291, %256 : vector<8x32xf32>
    %296 = arith.mulf %290, %294 : vector<8x32xf32>
    %297 = arith.addf %295, %296 : vector<8x32xf32>
    %298 = math.tanh %297 : vector<8x32xf32>
    %299 = arith.mulf %292, %298 : vector<8x32xf32>
    %300 = arith.truncf %299 : vector<8x32xf32> to vector<8x32xbf16>
    %cst_65 = arith.constant dense<0.000000e+00> : vector<8x128xf32>
    %301 = tpu.matmul %300, %9, %cst_65 {dimension_numbers = #tpu.dot_dimension_numbers<[1], [0], [0], [1], [0, 0, 1, 1], [], []>} : vector<8x32xbf16>, vector<32x128xbf16>, vector<8x128xf32> -> vector<8x128xf32>
    %302 = arith.addf %301, %12 : vector<8x128xf32>
    %c7 = arith.constant 7 : index
    %c0_66 = arith.constant 0 : index
    %c0_67 = arith.constant 0 : index
    %303 = vector.load %arg1[%c7, %c0_66, %c0_67] : memref<8x8x128xf32, #tpu.memory_space<vmem>>, vector<1x8x128xf32>
    %304 = vector.shape_cast %303 : vector<1x8x128xf32> to vector<8x128xf32>
    %305 = arith.truncf %281 : vector<8x32xf32> to vector<8x32xbf16>
    %cst_68 = arith.constant dense<0.000000e+00> : vector<8x128xf32>
    %306 = tpu.matmul %305, %7, %cst_68 {dimension_numbers = #tpu.dot_dimension_numbers<[1], [0], [0], [1], [0, 0, 1, 1], [], []>} : vector<8x32xbf16>, vector<32x128xbf16>, vector<8x128xf32> -> vector<8x128xf32>
    %307 = arith.addf %304, %306 : vector<8x128xf32>
    %308 = arith.negf %307 : vector<8x128xf32>
    %309 = math.exp %308 : vector<8x128xf32>
    %cst_69 = arith.constant 1.000000e+00 : f32
    %310 = vector.broadcast %cst_69 : f32 to vector<8x128xf32>
    %311 = arith.addf %310, %309 : vector<8x128xf32>
    %312 = arith.divf %310, %311 : vector<8x128xf32>
    %313 = vector.extract_strided_slice %312 {offsets = [0, 0], sizes = [8, 32], strides = [1, 1]} : vector<8x128xf32> to vector<8x32xf32>
    %314 = vector.extract_strided_slice %312 {offsets = [0, 32], sizes = [8, 32], strides = [1, 1]} : vector<8x128xf32> to vector<8x32xf32>
    %315 = vector.extract_strided_slice %312 {offsets = [0, 96], sizes = [8, 32], strides = [1, 1]} : vector<8x128xf32> to vector<8x32xf32>
    %316 = vector.extract_strided_slice %307 {offsets = [0, 64], sizes = [8, 32], strides = [1, 1]} : vector<8x128xf32> to vector<8x32xf32>
    %317 = math.tanh %316 : vector<8x32xf32>
    %318 = arith.mulf %314, %279 : vector<8x32xf32>
    %319 = arith.mulf %313, %317 : vector<8x32xf32>
    %320 = arith.addf %318, %319 : vector<8x32xf32>
    %321 = math.tanh %320 : vector<8x32xf32>
    %322 = arith.mulf %315, %321 : vector<8x32xf32>
    %323 = arith.truncf %322 : vector<8x32xf32> to vector<8x32xbf16>
    %cst_70 = arith.constant dense<0.000000e+00> : vector<8x128xf32>
    %324 = tpu.matmul %323, %8, %cst_70 {dimension_numbers = #tpu.dot_dimension_numbers<[1], [0], [0], [1], [0, 0, 1, 1], [], []>} : vector<8x32xbf16>, vector<32x128xbf16>, vector<8x128xf32> -> vector<8x128xf32>
    %325 = arith.addf %302, %324 : vector<8x128xf32>
    %326 = arith.negf %325 : vector<8x128xf32>
    %327 = math.exp %326 : vector<8x128xf32>
    %cst_71 = arith.constant 1.000000e+00 : f32
    %328 = vector.broadcast %cst_71 : f32 to vector<8x128xf32>
    %329 = arith.addf %328, %327 : vector<8x128xf32>
    %330 = arith.divf %328, %329 : vector<8x128xf32>
    %331 = vector.extract_strided_slice %330 {offsets = [0, 0], sizes = [8, 32], strides = [1, 1]} : vector<8x128xf32> to vector<8x32xf32>
    %332 = vector.extract_strided_slice %330 {offsets = [0, 32], sizes = [8, 32], strides = [1, 1]} : vector<8x128xf32> to vector<8x32xf32>
    %333 = vector.extract_strided_slice %330 {offsets = [0, 96], sizes = [8, 32], strides = [1, 1]} : vector<8x128xf32> to vector<8x32xf32>
    %334 = vector.extract_strided_slice %325 {offsets = [0, 64], sizes = [8, 32], strides = [1, 1]} : vector<8x128xf32> to vector<8x32xf32>
    %335 = math.tanh %334 : vector<8x32xf32>
    %336 = arith.mulf %332, %297 : vector<8x32xf32>
    %337 = arith.mulf %331, %335 : vector<8x32xf32>
    %338 = arith.addf %336, %337 : vector<8x32xf32>
    %339 = math.tanh %338 : vector<8x32xf32>
    %340 = arith.mulf %333, %339 : vector<8x32xf32>
    %c0_72 = arith.constant 0 : index
    %c0_73 = arith.constant 0 : index
    %341 = vector.load %arg9[%c0_72, %c0_73] : memref<8x32xf32, #tpu.memory_space<vmem>>, vector<8x32xf32>
    tpu.vector_store %arg9[%c0_72, %c0_73], %322 {strides = array<i32>} : memref<8x32xf32, #tpu.memory_space<vmem>>, vector<8x32xf32>,
    %c0_74 = arith.constant 0 : index
    %c0_75 = arith.constant 0 : index
    %342 = vector.load %arg10[%c0_74, %c0_75] : memref<8x32xf32, #tpu.memory_space<vmem>>, vector<8x32xf32>
    tpu.vector_store %arg10[%c0_74, %c0_75], %320 {strides = array<i32>} : memref<8x32xf32, #tpu.memory_space<vmem>>, vector<8x32xf32>,
    %c0_76 = arith.constant 0 : index
    %c0_77 = arith.constant 0 : index
    %343 = vector.load %arg11[%c0_76, %c0_77] : memref<8x32xf32, #tpu.memory_space<vmem>>, vector<8x32xf32>
    tpu.vector_store %arg11[%c0_76, %c0_77], %340 {strides = array<i32>} : memref<8x32xf32, #tpu.memory_space<vmem>>, vector<8x32xf32>,
    %c0_78 = arith.constant 0 : index
    %c0_79 = arith.constant 0 : index
    %344 = vector.load %arg12[%c0_78, %c0_79] : memref<8x32xf32, #tpu.memory_space<vmem>>, vector<8x32xf32>
    tpu.vector_store %arg12[%c0_78, %c0_79], %338 {strides = array<i32>} : memref<8x32xf32, #tpu.memory_space<vmem>>, vector<8x32xf32>,
    %c0_i32_80 = arith.constant 0 : i32
    %345 = arith.cmpi eq, %arg0, %c0_i32_80 : i32
    %346 = arith.extui %345 : i1 to i32
    %c0_i32_81 = arith.constant 0 : i32
    %347 = arith.cmpi ne, %346, %c0_i32_81 : i32
    scf.if %347 {
      %c0_82 = arith.constant 0 : index
      %c0_83 = arith.constant 0 : index
      %348 = vector.load %arg6[%c0_82, %c0_83] : memref<1x32xf32, #tpu.memory_space<vmem>>, vector<1x32xf32>
      %349 = vector.broadcast %348 : vector<1x32xf32> to vector<8x32xf32>
      %350 = arith.mulf %340, %349 : vector<8x32xf32>
      %cst_84 = arith.constant dense<0.000000e+00> : vector<8xf32>
      %351 = vector.multi_reduction <add>, %350, %cst_84 [1] : vector<8x32xf32> to vector<8xf32>
      %352 = vector.shape_cast %351 : vector<8xf32> to vector<8x1xf32>
      %c0_85 = arith.constant 0 : index
      %c0_86 = arith.constant 0 : index
      %353 = vector.load %arg7[%c0_85, %c0_86] : memref<1x1xf32, #tpu.memory_space<vmem>>, vector<1x1xf32>
      %354 = vector.broadcast %353 : vector<1x1xf32> to vector<8x1xf32>
      %355 = arith.addf %352, %354 : vector<8x1xf32>
      %c0_87 = arith.constant 0 : index
      %c0_88 = arith.constant 0 : index
      %356 = vector.load %arg8[%c0_87, %c0_88] : memref<8x1xf32, #tpu.memory_space<vmem>>, vector<8x1xf32>
      tpu.vector_store %arg8[%c0_87, %c0_88], %355 {strides = array<i32>} : memref<8x1xf32, #tpu.memory_space<vmem>>, vector<8x1xf32>,
    } else {
    }
    return
  }
  func.func @transform_0(%arg0: i32) -> (i32, i32, i32) {
    %c0_i32 = arith.constant 0 : i32
    %c0_i32_0 = arith.constant 0 : i32
    %c0_i32_1 = arith.constant 0 : i32
    return %arg0, %c0_i32, %c0_i32_0 : i32, i32, i32
  }
  func.func @transform_1(%arg0: i32) -> (i32, i32) {
    %c0_i32 = arith.constant 0 : i32
    %c0_i32_0 = arith.constant 0 : i32
    %c0_i32_1 = arith.constant 0 : i32
    return %c0_i32, %c0_i32_0 : i32, i32
  }
  func.func @transform_2(%arg0: i32) -> (i32, i32) {
    %c0_i32 = arith.constant 0 : i32
    %c0_i32_0 = arith.constant 0 : i32
    %c0_i32_1 = arith.constant 0 : i32
    return %c0_i32, %c0_i32_0 : i32, i32
  }
  func.func @transform_3(%arg0: i32) -> (i32, i32) {
    %c0_i32 = arith.constant 0 : i32
    %c0_i32_0 = arith.constant 0 : i32
    %c0_i32_1 = arith.constant 0 : i32
    return %c0_i32, %c0_i32_0 : i32, i32
  }
  func.func @transform_4(%arg0: i32) -> (i32, i32) {
    %c0_i32 = arith.constant 0 : i32
    %c0_i32_0 = arith.constant 0 : i32
    %c0_i32_1 = arith.constant 0 : i32
    return %c0_i32, %c0_i32_0 : i32, i32
  }
  func.func @transform_5(%arg0: i32) -> (i32, i32) {
    %c0_i32 = arith.constant 0 : i32
    %c0_i32_0 = arith.constant 0 : i32
    %c0_i32_1 = arith.constant 0 : i32
    return %c0_i32, %c0_i32_0 : i32, i32
  }
  func.func @transform_6(%arg0: i32) -> (i32, i32) {
    %c0_i32 = arith.constant 0 : i32
    %c0_i32_0 = arith.constant 0 : i32
    %c0_i32_1 = arith.constant 0 : i32
    return %c0_i32, %c0_i32_0 : i32, i32
  }
  func.func @transform_7(%arg0: i32) -> (i32, i32) {
    %c0_i32 = arith.constant 0 : i32
    %c0_i32_0 = arith.constant 0 : i32
    %c0_i32_1 = arith.constant 0 : i32
    return %c0_i32, %c0_i32_0 : i32, i32
  }
}

</mosaic_0001>

<llo_original>
// kernel: tpu_custom_call.1
$region0: #{tpu_custom_call.1}
  #allocation0 [shape = 'u32[]', space=smem, size = 0x4, offset = 0x4, fixed_abs, tag = 'smem constant byte address 0x4 - core index']
  #allocation1 [shape = 'u32[144,128]{1,0:T(1,128)}', space=vmem, size = 0x12000, scoped, tag = 'internal scratch']
  #allocation2 [shape = 'f32[8,32]{1,0:T(8,128)}', space=vmem, size = 0x1000, scoped, tag = 'scratch operand']
  #allocation3 [shape = 'f32[8,32]{1,0:T(8,128)}', space=vmem, size = 0x1000, scoped, tag = 'scratch operand']
  #allocation4 [shape = 'f32[8,32]{1,0:T(8,128)}', space=vmem, size = 0x1000, scoped, tag = 'scratch operand']
  #allocation5 [shape = 'f32[8,32]{1,0:T(8,128)}', space=vmem, size = 0x1000, scoped, tag = 'scratch operand']
  #allocation6 [shape = 'f32[1,1]{1,0:T(1,128)S(1)}', space=vmem, size = 0x200, scoped, tag = 'scoped memory for tpu_custom_call.1']
  %s0 = inlined_call_operand.hbm [shape: f32[8,8,128], index: 0, kind: input, shape index: {}]
  %s1 = inlined_call_operand.hbm [shape: bf16[32,128], index: 1, kind: input, shape index: {}]
  %s2 = inlined_call_operand.hbm [shape: bf16[32,128], index: 2, kind: input, shape index: {}]
  %s3 = inlined_call_operand.hbm [shape: bf16[32,128], index: 3, kind: input, shape index: {}]
  %s4 = inlined_call_operand.vmem [shape: f32[1,128], index: 4, kind: input, shape index: {}]
  %s5 = inlined_call_operand.vmem [shape: f32[1,32], index: 5, kind: input, shape index: {}]
  %s6 = inlined_call_operand.<no memory space> [shape: f32[1,1], index: 6, kind: input, shape index: {}]
  %s7 = inlined_call_operand.vmem [shape: f32[8,1], index: 7, kind: output, shape index: {}]
  %s8 = sld [smem:[#allocation0]]
  $region62: #{tpu_custom_call.1} parent=0
    _
  %s10 = ssub.s32 1, %s8
  %s11 = scalar_select 0, %s10, %s8
  %v12 = vstv %s6
  %13 = vst [vmem:[#allocation6] sm:$0x1] %v12
  $region1: #{tpu_custom_call.1} parent=0
    #allocation7 [shape = 'u8[32768]{0}', space=vmem, size = 0x8000, scoped, tag = 'input window, operand 0, single buffered']
    #allocation8 [shape = 's32[1]{0}', space=sflag, size = 0x4, scoped, tag = 'scoped memory for tpu_custom_call.1']
    #allocation9 [shape = 'u8[8192]{0}', space=vmem, size = 0x2000, scoped, tag = 'input window, operand 1, single buffered']
    #allocation10 [shape = 's32[1]{0}', space=sflag, size = 0x4, scoped, tag = 'scoped memory for tpu_custom_call.1']
    #allocation11 [shape = 'u8[8192]{0}', space=vmem, size = 0x2000, scoped, tag = 'input window, operand 2, single buffered']
    #allocation12 [shape = 'u8[8192]{0}', space=vmem, size = 0x2000, scoped, tag = 'input window, operand 3, single buffered']
    #allocation13 [shape = 's32[1]{0}', space=sflag, size = 0x4, scoped, tag = 'scoped memory for tpu_custom_call.1']
    %14 = vsyncpa [#allocation8], 0
    %15 = vsyncpa [#allocation10], 0
    %16 = vsyncpa [#allocation13], 0
    // Predicated region
    $region2: #{tpu_custom_call.1} parent=1 // pred_check
      _
    $region3: #{tpu_custom_call.1} parent=1 // pred_check_branch
      %18 = sbr.rel (0) target = $region5
    $region4: #{tpu_custom_call.1} parent=1 // pred_region
      %s20 = ssub.s32 1024, 1024
      %21 = vsyncadd [#allocation8], %s20
      %s22 = sshll.u32 [#allocation7], 4
      %s23 = int_to_ptr.vmem [resolvable:$true] %s22
      %28 = dma.hbm_to_vmem [thread:$0]  %s0, 1024, %s23, [#allocation8], 128, 128, 8
    $region5: #{tpu_custom_call.1} parent=1 // pred_fallthru
      _
    // Predicated region
    $region6: #{tpu_custom_call.1} parent=1 // pred_check
      _
    $region7: #{tpu_custom_call.1} parent=1 // pred_check_branch
      %30 = sbr.rel (0) target = $region9
    $region8: #{tpu_custom_call.1} parent=1 // pred_region
      %s32 = ssub.s32 256, 256
      %33 = vsyncadd [#allocation10], %s32
      %s34 = sshll.u32 [#allocation9], 4
      %s35 = int_to_ptr.vmem [resolvable:$true] %s34
      %40 = dma.hbm_to_vmem [thread:$0]  %s1, 256, %s35, [#allocation10], 64, 64, 4
    $region9: #{tpu_custom_call.1} parent=1 // pred_fallthru
      _
    // Predicated region
    $region10: #{tpu_custom_call.1} parent=1 // pred_check
      _
    $region11: #{tpu_custom_call.1} parent=1 // pred_check_branch
      %42 = sbr.rel (0) target = $region13
    $region12: #{tpu_custom_call.1} parent=1 // pred_region
      %s44 = ssub.s32 256, 256
      %45 = vsyncadd [#allocation10], %s44
      %s46 = sshll.u32 [#allocation11], 4
      %s47 = int_to_ptr.vmem [resolvable:$true] %s46
      %52 = dma.hbm_to_vmem [thread:$0]  %s2, 256, %s47, [#allocation10], 64, 64, 4
    $region13: #{tpu_custom_call.1} parent=1 // pred_fallthru
      _
    // Predicated region
    $region14: #{tpu_custom_call.1} parent=1 // pred_check
      _
    $region15: #{tpu_custom_call.1} parent=1 // pred_check_branch
      %54 = sbr.rel (0) target = $region17
    $region16: #{tpu_custom_call.1} parent=1 // pred_region
      %s56 = ssub.s32 256, 256
      %57 = vsyncadd [#allocation13], %s56
      %s58 = sshll.u32 [#allocation12], 4
      %s59 = int_to_ptr.vmem [resolvable:$true] %s58
      %64 = dma.hbm_to_vmem [thread:$0]  %s3, 256, %s59, [#allocation13], 64, 64, 4
    $region17: #{tpu_custom_call.1} parent=1 // pred_fallthru
      _
    // Predicated region
    $region18: #{tpu_custom_call.1} parent=1 // pred_check
      _
    $region19: #{tpu_custom_call.1} parent=1 // pred_check_branch
      %66 = sbr.rel (0) target = $region21
    $region20: #{tpu_custom_call.1} parent=1 // pred_region
      _
    $region21: #{tpu_custom_call.1} parent=1 // pred_fallthru
      _
    // Predicated region
    $region22: #{tpu_custom_call.1} parent=1 // pred_check
      _
    $region23: #{tpu_custom_call.1} parent=1 // pred_check_branch
      %68 = sbr.rel (0) target = $region25
    $region24: #{tpu_custom_call.1} parent=1 // pred_region
      _
    $region25: #{tpu_custom_call.1} parent=1 // pred_fallthru
      _
    // Predicated region
    $region26: #{tpu_custom_call.1} parent=1 // pred_check
      _
    $region27: #{tpu_custom_call.1} parent=1 // pred_check_branch
      %70 = sbr.rel (0) target = $region29
    $region28: #{tpu_custom_call.1} parent=1 // pred_region
      _
    $region29: #{tpu_custom_call.1} parent=1 // pred_fallthru
      _
    // Predicated region
    $region30: #{tpu_custom_call.1} parent=1 // pred_check
      _
    $region31: #{tpu_custom_call.1} parent=1 // pred_check_branch
      %72 = sbr.rel (0) target = $region33
    $region32: #{tpu_custom_call.1} parent=1 // pred_region
      %73 = dma.done [#allocation8], 1024
    $region33: #{tpu_custom_call.1} parent=1 // pred_fallthru
      _
    // Predicated region
    $region34: #{tpu_custom_call.1} parent=1 // pred_check
      _
    $region35: #{tpu_custom_call.1} parent=1 // pred_check_branch
      %75 = sbr.rel (0) target = $region37
    $region36: #{tpu_custom_call.1} parent=1 // pred_region
      %76 = dma.done [#allocation10], 256
    $region37: #{tpu_custom_call.1} parent=1 // pred_fallthru
      _
    // Predicated region
    $region38: #{tpu_custom_call.1} parent=1 // pred_check
      _
    $region39: #{tpu_custom_call.1} parent=1 // pred_check_branch
      %78 = sbr.rel (0) target = $region41
    $region40: #{tpu_custom_call.1} parent=1 // pred_region
      %79 = dma.done [#allocation10], 256
    $region41: #{tpu_custom_call.1} parent=1 // pred_fallthru
      _
    // Predicated region
    $region42: #{tpu_custom_call.1} parent=1 // pred_check
      _
    $region43: #{tpu_custom_call.1} parent=1 // pred_check_branch
      %81 = sbr.rel (0) target = $region45
    $region44: #{tpu_custom_call.1} parent=1 // pred_region
      %82 = dma.done [#allocation13], 256
    $region45: #{tpu_custom_call.1} parent=1 // pred_fallthru
      _
    %p84 = scmp.eq.s32.totalorder 0, 0
    // Predicated region
    $region46: #{tpu_custom_call.1} parent=1 // pred_check
      %p85 = pneg %p84
    $region47: #{tpu_custom_call.1} parent=1 // pred_check_branch
      %87 = sbr.rel (%p85) target = $region49
    $region48: #{tpu_custom_call.1} parent=1 // pred_region
      %vm88 = vcmask 261120
      %89 = vst.msk [vmem:[#allocation2] sm:$0xff] %vm88, 0.0
      %90 = vst.msk [vmem:[#allocation3] sm:$0xff] %vm88, 0.0
      %91 = vst.msk [vmem:[#allocation4] sm:$0xff] %vm88, 0.0
      %92 = vst.msk [vmem:[#allocation5] sm:$0xff] %vm88, 0.0
    $region49: #{tpu_custom_call.1} parent=1 // pred_fallthru
      _
    %v93 = vld [vmem:[#allocation2] sm:$0xff]
    %v94 = vld [vmem:[#allocation3] sm:$0xff]
    %v95 = vld [vmem:[#allocation4] sm:$0xff]
    %v96 = vld [vmem:[#allocation5] sm:$0xff]
    %v97 = vld [vmem:[#allocation9] sm:$0xf]
    %v98 = vld [vmem:[#allocation9 + $0x4] sm:$0xf]
    %v99 = vld [vmem:[#allocation9 + $0x8] sm:$0xf]
    %v100 = vld [vmem:[#allocation9 + $0xc] sm:$0xf]
    %v101 = vld [vmem:[#allocation11] sm:$0xf]
    %v102 = vld [vmem:[#allocation11 + $0x4] sm:$0xf]
    %v103 = vld [vmem:[#allocation11 + $0x8] sm:$0xf]
    %v104 = vld [vmem:[#allocation11 + $0xc] sm:$0xf]
    %v105 = vld [vmem:[#allocation12] sm:$0xf]
    %v106 = vld [vmem:[#allocation12 + $0x4] sm:$0xf]
    %v107 = vld [vmem:[#allocation12 + $0x8] sm:$0xf]
    %v108 = vld [vmem:[#allocation12 + $0xc] sm:$0xf]
    %v109 = vld [vmem:[%s4] sm:$0x1]
    %v111 = vlaneseq
    %v112 = vshrl.u32 %v111, 7
    %v113 = vsub.s32 0, %v112
    %v114 = vrot.slane %v109, %v113
    %v116 = vpack.c.bf16 %v95, %v95
    %v121 = vunpack.c.l.b16 %v105
    %v122 = vunpack.c.l.b16 %v106
    %v123 = vunpack.c.l.b16 %v107
    %v124 = vunpack.c.l.b16 %v108
    %v125 = vpack.c.b16 %v122, %v121
    %v126 = vpack.c.b16 %v124, %v123
    %vm129 = vcmask 261120
    %v131 = vsel %vm129, %v116, 0
    %133 = vmatprep.subr.bf16.mxu0 0
    %134 = vmatpush1.bf16.msra.mxu0 %v125
    %135 = vmatprep.subr.bf16.mxu0 0
    %136 = vmatpush1.bf16.msra.mxu0 %v126
    %137 = vmatprep.subr.bf16.mxu0 0
    %138 = vmatpush1.bf16.msra.mxu0 0
    %139 = vmatprep.subr.bf16.mxu0 0
    %140 = vmatpush1.bf16.msra.mxu0 0
    %141 = vmatprep.subr.bf16.mxu0 0
    %142 = vmatpush1.bf16.msra.mxu0 0
    %143 = vmatprep.subr.bf16.mxu0 0
    %144 = vmatpush1.bf16.msra.mxu0 0
    %145 = vmatprep.subr.bf16.mxu0 0
    %146 = vmatpush1.bf16.msra.mxu0 0
    %147 = vmatprep.subr.bf16.mxu0 0
    %148 = vmatpush1.bf16.msra.mxu0 0
    %149 = vmatprep.subr.bf16.mxu0 0
    %150 = vmatpush1.bf16.msra.mxu0 0
    %151 = vmatprep.subr.bf16.mxu0 0
    %152 = vmatpush1.bf16.msra.mxu0 0
    %153 = vmatprep.subr.bf16.mxu0 0
    %154 = vmatpush1.bf16.msra.mxu0 0
    %155 = vmatprep.subr.bf16.mxu0 0
    %156 = vmatpush1.bf16.msra.mxu0 0
    %157 = vmatprep.subr.bf16.mxu0 0
    %158 = vmatpush1.bf16.msra.mxu0 0
    %159 = vmatprep.subr.bf16.mxu0 0
    %160 = vmatpush1.bf16.msra.mxu0 0
    %161 = vmatprep.subr.bf16.mxu0 0
    %162 = vmatpush1.bf16.msra.mxu0 0
    %163 = vmatprep.subr.bf16.mxu0 0
    %164 = vmatpush1.bf16.msra.mxu0 0
    %165 = vmatprep.mubr.bf16.mxu0 0
    %166 = vmatmul.mubr.bf16.gmra.mrb[0].mxu0 %v131
    %v167 = vpop.f32.mrb[0].mxu0
    %v168 = vadd.f32 %v114, %v167
    %v169 = vpop.f32.mrb[0].mxu0
    %v170 = vpop.f32.mrb[0].mxu0
    %v171 = vpop.f32.mrb[0].mxu0
    %172 = vdwg.mxu0
    %v173 = vld [vmem:[#allocation7] sm:$0xff]
    %v174 = vpack.c.bf16 %v93, %v93
    %v179 = vunpack.c.l.b16 %v97
    %v180 = vunpack.c.l.b16 %v98
    %v181 = vunpack.c.l.b16 %v99
    %v182 = vunpack.c.l.b16 %v100
    %v183 = vpack.c.b16 %v180, %v179
    %v184 = vpack.c.b16 %v182, %v181
    %v188 = vsel %vm129, %v174, 0
    %190 = vmatprep.subr.bf16.mxu0 0
    %191 = vmatpush1.bf16.msra.mxu0 %v183
    %192 = vmatprep.subr.bf16.mxu0 0
    %193 = vmatpush1.bf16.msra.mxu0 %v184
    %194 = vmatprep.subr.bf16.mxu0 0
    %195 = vmatpush1.bf16.msra.mxu0 0
    %196 = vmatprep.subr.bf16.mxu0 0
    %197 = vmatpush1.bf16.msra.mxu0 0
    %198 = vmatprep.subr.bf16.mxu0 0
    %199 = vmatpush1.bf16.msra.mxu0 0
    %200 = vmatprep.subr.bf16.mxu0 0
    %201 = vmatpush1.bf16.msra.mxu0 0
    %202 = vmatprep.subr.bf16.mxu0 0
    %203 = vmatpush1.bf16.msra.mxu0 0
    %204 = vmatprep.subr.bf16.mxu0 0
    %205 = vmatpush1.bf16.msra.mxu0 0
    %206 = vmatprep.subr.bf16.mxu0 0
    %207 = vmatpush1.bf16.msra.mxu0 0
    %208 = vmatprep.subr.bf16.mxu0 0
    %209 = vmatpush1.bf16.msra.mxu0 0
    %210 = vmatprep.subr.bf16.mxu0 0
    %211 = vmatpush1.bf16.msra.mxu0 0
    %212 = vmatprep.subr.bf16.mxu0 0
    %213 = vmatpush1.bf16.msra.mxu0 0
    %214 = vmatprep.subr.bf16.mxu0 0
    %215 = vmatpush1.bf16.msra.mxu0 0
    %216 = vmatprep.subr.bf16.mxu0 0
    %217 = vmatpush1.bf16.msra.mxu0 0
    %218 = vmatprep.subr.bf16.mxu0 0
    %219 = vmatpush1.bf16.msra.mxu0 0
    %220 = vmatprep.subr.bf16.mxu0 0
    %221 = vmatpush1.bf16.msra.mxu0 0
    %222 = vmatprep.mubr.bf16.mxu0 0
    %223 = vmatmul.mubr.bf16.gmra.mrb[0].mxu0 %v188
    %v224 = vpop.f32.mrb[0].mxu0
    %v225 = vadd.f32 0.0, %v224
    %v226 = vpop.f32.mrb[0].mxu0
    %v227 = vpop.f32.mrb[0].mxu0
    %v228 = vpop.f32.mrb[0].mxu0
    %229 = vdwg.mxu0
    %v230 = vadd.f32 %v173, %v225
    %v231 = vxor.u32 %v230, 2147483648
    %v232 = vmul.f32 %v231, 1.442695
    %v233 = vpow.pop %v232
    %v234 = vadd.f32 %v233, 1.0
    %v235 = vrcp.pop %v234
    %v236 = vmul.f32 1.0, %v235
    %v237 = vtanh.pop %v230
    %239 = vrot.lane.b32.xlu0 %v94, 32
    %v240 = vpop.permute.xlu0 %239
    %v242 = vmul.f32 %v236, %v240
    %244 = vrot.lane.b32.xlu0 %v237, 64
    %v245 = vpop.permute.xlu0 %244
    %v247 = vmul.f32 %v236, %v245
    %249 = vrot.lane.b32.xlu0 %v247, 32
    %v250 = vpop.permute.xlu0 %249
    %v252 = vadd.f32 %v242, %v250
    %v253 = vtanh.pop %v252
    %255 = vrot.lane.b32.xlu0 %v253, 64
    %v256 = vpop.permute.xlu0 %255
    %v258 = vmul.f32 %v236, %v256
    %v259 = vpack.c.bf16 %v258, %v258
    %261 = vrot.lane.b32.xlu0 %v259, 32
    %v262 = vpop.permute.xlu0 %261
    %v267 = vunpack.c.l.b16 %v101
    %v268 = vunpack.c.l.b16 %v102
    %v269 = vunpack.c.l.b16 %v103
    %v270 = vunpack.c.l.b16 %v104
    %v271 = vpack.c.b16 %v268, %v267
    %v272 = vpack.c.b16 %v270, %v269
    %v276 = vsel %vm129, %v262, 0
    %278 = vmatprep.subr.bf16.mxu0 0
    %279 = vmatpush1.bf16.msra.mxu0 %v271
    %280 = vmatprep.subr.bf16.mxu0 0
    %281 = vmatpush1.bf16.msra.mxu0 %v272
    %282 = vmatprep.subr.bf16.mxu0 0
    %283 = vmatpush1.bf16.msra.mxu0 0
    %284 = vmatprep.subr.bf16.mxu0 0
    %285 = vmatpush1.bf16.msra.mxu0 0
    %286 = vmatprep.subr.bf16.mxu0 0
    %287 = vmatpush1.bf16.msra.mxu0 0
    %288 = vmatprep.subr.bf16.mxu0 0
    %289 = vmatpush1.bf16.msra.mxu0 0
    %290 = vmatprep.subr.bf16.mxu0 0
    %291 = vmatpush1.bf16.msra.mxu0 0
    %292 = vmatprep.subr.bf16.mxu0 0
    %293 = vmatpush1.bf16.msra.mxu0 0
    %294 = vmatprep.subr.bf16.mxu0 0
    %295 = vmatpush1.bf16.msra.mxu0 0
    %296 = vmatprep.subr.bf16.mxu0 0
    %297 = vmatpush1.bf16.msra.mxu0 0
    %298 = vmatprep.subr.bf16.mxu0 0
    %299 = vmatpush1.bf16.msra.mxu0 0
    %300 = vmatprep.subr.bf16.mxu0 0
    %301 = vmatpush1.bf16.msra.mxu0 0
    %302 = vmatprep.subr.bf16.mxu0 0
    %303 = vmatpush1.bf16.msra.mxu0 0
    %304 = vmatprep.subr.bf16.mxu0 0
    %305 = vmatpush1.bf16.msra.mxu0 0
    %306 = vmatprep.subr.bf16.mxu0 0
    %307 = vmatpush1.bf16.msra.mxu0 0
    %308 = vmatprep.subr.bf16.mxu0 0
    %309 = vmatpush1.bf16.msra.mxu0 0
    %310 = vmatprep.mubr.bf16.mxu0 0
    %311 = vmatmul.mubr.bf16.gmra.mrb[0].mxu0 %v276
    %v312 = vpop.f32.mrb[0].mxu0
    %v313 = vadd.f32 0.0, %v312
    %v314 = vpop.f32.mrb[0].mxu0
    %v315 = vpop.f32.mrb[0].mxu0
    %v316 = vpop.f32.mrb[0].mxu0
    %317 = vdwg.mxu0
    %v318 = vadd.f32 %v168, %v313
    %v319 = vxor.u32 %v318, 2147483648
    %v320 = vmul.f32 %v319, 1.442695
    %v321 = vpow.pop %v320
    %v322 = vadd.f32 %v321, 1.0
    %v323 = vrcp.pop %v322
    %v324 = vmul.f32 1.0, %v323
    %v325 = vtanh.pop %v318
    %327 = vrot.lane.b32.xlu0 %v96, 32
    %v328 = vpop.permute.xlu0 %327
    %v330 = vmul.f32 %v324, %v328
    %332 = vrot.lane.b32.xlu0 %v325, 64
    %v333 = vpop.permute.xlu0 %332
    %v335 = vmul.f32 %v324, %v333
    %337 = vrot.lane.b32.xlu0 %v335, 32
    %v338 = vpop.permute.xlu0 %337
    %v340 = vadd.f32 %v330, %v338
    %v341 = vtanh.pop %v340
    %343 = vrot.lane.b32.xlu0 %v341, 64
    %v344 = vpop.permute.xlu0 %343
    %v346 = vmul.f32 %v324, %v344
    %v347 = vpack.c.bf16 %v346, %v346
    %349 = vrot.lane.b32.xlu0 %v347, 32
    %v350 = vpop.permute.xlu0 %349
    %v352 = vsel %vm129, %v350, 0
    %354 = vmatprep.subr.bf16.mxu0 0
    %355 = vmatpush1.bf16.msra.mxu0 %v125
    %356 = vmatprep.subr.bf16.mxu0 0
    %357 = vmatpush1.bf16.msra.mxu0 %v126
    %358 = vmatprep.subr.bf16.mxu0 0
    %359 = vmatpush1.bf16.msra.mxu0 0
    %360 = vmatprep.subr.bf16.mxu0 0
    %361 = vmatpush1.bf16.msra.mxu0 0
    %362 = vmatprep.subr.bf16.mxu0 0
    %363 = vmatpush1.bf16.msra.mxu0 0
    %364 = vmatprep.subr.bf16.mxu0 0
    %365 = vmatpush1.bf16.msra.mxu0 0
    %366 = vmatprep.subr.bf16.mxu0 0
    %367 = vmatpush1.bf16.msra.mxu0 0
    %368 = vmatprep.subr.bf16.mxu0 0
    %369 = vmatpush1.bf16.msra.mxu0 0
    %370 = vmatprep.subr.bf16.mxu0 0
    %371 = vmatpush1.bf16.msra.mxu0 0
    %372 = vmatprep.subr.bf16.mxu0 0
    %373 = vmatpush1.bf16.msra.mxu0 0
    %374 = vmatprep.subr.bf16.mxu0 0
    %375 = vmatpush1.bf16.msra.mxu0 0
    %376 = vmatprep.subr.bf16.mxu0 0
    %377 = vmatpush1.bf16.msra.mxu0 0
    %378 = vmatprep.subr.bf16.mxu0 0
    %379 = vmatpush1.bf16.msra.mxu0 0
    %380 = vmatprep.subr.bf16.mxu0 0
    %381 = vmatpush1.bf16.msra.mxu0 0
    %382 = vmatprep.subr.bf16.mxu0 0
    %383 = vmatpush1.bf16.msra.mxu0 0
    %384 = vmatprep.subr.bf16.mxu0 0
    %385 = vmatpush1.bf16.msra.mxu0 0
    %386 = vmatprep.mubr.bf16.mxu0 0
    %387 = vmatmul.mubr.bf16.gmra.mrb[0].mxu0 %v352
    %v388 = vpop.f32.mrb[0].mxu0
    %v389 = vadd.f32 %v114, %v388
    %v390 = vpop.f32.mrb[0].mxu0
    %v391 = vpop.f32.mrb[0].mxu0
    %v392 = vpop.f32.mrb[0].mxu0
    %393 = vdwg.mxu0
    %s394 = scalar_lea.vmem [#allocation7], 8
    %v395 = vld [vmem:[%s394] sm:$0xff]
    %396 = vmatprep.subr.bf16.mxu0 0
    %397 = vmatpush1.bf16.msra.mxu0 %v183
    %398 = vmatprep.subr.bf16.mxu0 0
    %399 = vmatpush1.bf16.msra.mxu0 %v184
    %400 = vmatprep.subr.bf16.mxu0 0
    %401 = vmatpush1.bf16.msra.mxu0 0
    %402 = vmatprep.subr.bf16.mxu0 0
    %403 = vmatpush1.bf16.msra.mxu0 0
    %404 = vmatprep.subr.bf16.mxu0 0
    %405 = vmatpush1.bf16.msra.mxu0 0
    %406 = vmatprep.subr.bf16.mxu0 0
    %407 = vmatpush1.bf16.msra.mxu0 0
    %408 = vmatprep.subr.bf16.mxu0 0
    %409 = vmatpush1.bf16.msra.mxu0 0
    %410 = vmatprep.subr.bf16.mxu0 0
    %411 = vmatpush1.bf16.msra.mxu0 0
    %412 = vmatprep.subr.bf16.mxu0 0
    %413 = vmatpush1.bf16.msra.mxu0 0
    %414 = vmatprep.subr.bf16.mxu0 0
    %415 = vmatpush1.bf16.msra.mxu0 0
    %416 = vmatprep.subr.bf16.mxu0 0
    %417 = vmatpush1.bf16.msra.mxu0 0
    %418 = vmatprep.subr.bf16.mxu0 0
    %419 = vmatpush1.bf16.msra.mxu0 0
    %420 = vmatprep.subr.bf16.mxu0 0
    %421 = vmatpush1.bf16.msra.mxu0 0
    %422 = vmatprep.subr.bf16.mxu0 0
    %423 = vmatpush1.bf16.msra.mxu0 0
    %424 = vmatprep.subr.bf16.mxu0 0
    %425 = vmatpush1.bf16.msra.mxu0 0
    %426 = vmatprep.subr.bf16.mxu0 0
    %427 = vmatpush1.bf16.msra.mxu0 0
    %428 = vmatprep.mubr.bf16.mxu0 0
    %429 = vmatmul.mubr.bf16.gmra.mrb[0].mxu0 %v276
    %v430 = vpop.f32.mrb[0].mxu0
    %v431 = vadd.f32 0.0, %v430
    %v432 = vpop.f32.mrb[0].mxu0
    %v433 = vpop.f32.mrb[0].mxu0
    %v434 = vpop.f32.mrb[0].mxu0
    %435 = vdwg.mxu0
    %v436 = vadd.f32 %v395, %v431
    %v437 = vxor.u32 %v436, 2147483648
    %v438 = vmul.f32 %v437, 1.442695
    %v439 = vpow.pop %v438
    %v440 = vadd.f32 %v439, 1.0
    %v441 = vrcp.pop %v440
    %v442 = vmul.f32 1.0, %v441
    %v443 = vtanh.pop %v436
    %v444 = vmul.f32 %v442, %v252
    %446 = vrot.lane.b32.xlu0 %v443, 64
    %v447 = vpop.permute.xlu0 %446
    %v449 = vmul.f32 %v442, %v447
    %451 = vrot.lane.b32.xlu0 %v449, 32
    %v452 = vpop.permute.xlu0 %451
    %v454 = vadd.f32 %v444, %v452
    %v455 = vtanh.pop %v454
    %457 = vrot.lane.b32.xlu0 %v455, 64
    %v458 = vpop.permute.xlu0 %457
    %v460 = vmul.f32 %v442, %v458
    %v461 = vpack.c.bf16 %v460, %v460
    %463 = vrot.lane.b32.xlu0 %v461, 32
    %v464 = vpop.permute.xlu0 %463
    %v466 = vsel %vm129, %v464, 0
    %468 = vmatprep.subr.bf16.mxu0 0
    %469 = vmatpush1.bf16.msra.mxu0 %v271
    %470 = vmatprep.subr.bf16.mxu0 0
    %471 = vmatpush1.bf16.msra.mxu0 %v272
    %472 = vmatprep.subr.bf16.mxu0 0
    %473 = vmatpush1.bf16.msra.mxu0 0
    %474 = vmatprep.subr.bf16.mxu0 0
    %475 = vmatpush1.bf16.msra.mxu0 0
    %476 = vmatprep.subr.bf16.mxu0 0
    %477 = vmatpush1.bf16.msra.mxu0 0
    %478 = vmatprep.subr.bf16.mxu0 0
    %479 = vmatpush1.bf16.msra.mxu0 0
    %480 = vmatprep.subr.bf16.mxu0 0
    %481 = vmatpush1.bf16.msra.mxu0 0
    %482 = vmatprep.subr.bf16.mxu0 0
    %483 = vmatpush1.bf16.msra.mxu0 0
    %484 = vmatprep.subr.bf16.mxu0 0
    %485 = vmatpush1.bf16.msra.mxu0 0
    %486 = vmatprep.subr.bf16.mxu0 0
    %487 = vmatpush1.bf16.msra.mxu0 0
    %488 = vmatprep.subr.bf16.mxu0 0
    %489 = vmatpush1.bf16.msra.mxu0 0
    %490 = vmatprep.subr.bf16.mxu0 0
    %491 = vmatpush1.bf16.msra.mxu0 0
    %492 = vmatprep.subr.bf16.mxu0 0
    %493 = vmatpush1.bf16.msra.mxu0 0
    %494 = vmatprep.subr.bf16.mxu0 0
    %495 = vmatpush1.bf16.msra.mxu0 0
    %496 = vmatprep.subr.bf16.mxu0 0
    %497 = vmatpush1.bf16.msra.mxu0 0
    %498 = vmatprep.subr.bf16.mxu0 0
    %499 = vmatpush1.bf16.msra.mxu0 0
    %500 = vmatprep.mubr.bf16.mxu0 0
    %501 = vmatmul.mubr.bf16.gmra.mrb[0].mxu0 %v466
    %v502 = vpop.f32.mrb[0].mxu0
    %v503 = vadd.f32 0.0, %v502
    %v504 = vpop.f32.mrb[0].mxu0
    %v505 = vpop.f32.mrb[0].mxu0
    %v506 = vpop.f32.mrb[0].mxu0
    %507 = vdwg.mxu0
    %v508 = vadd.f32 %v389, %v503
    %v509 = vxor.u32 %v508, 2147483648
    %v510 = vmul.f32 %v509, 1.442695
    %v511 = vpow.pop %v510
    %v512 = vadd.f32 %v511, 1.0
    %v513 = vrcp.pop %v512
    %v514 = vmul.f32 1.0, %v513
    %v515 = vtanh.pop %v508
    %v516 = vmul.f32 %v514, %v340
    %518 = vrot.lane.b32.xlu0 %v515, 64
    %v519 = vpop.permute.xlu0 %518
    %v521 = vmul.f32 %v514, %v519
    %523 = vrot.lane.b32.xlu0 %v521, 32
    %v524 = vpop.permute.xlu0 %523
    %v526 = vadd.f32 %v516, %v524
    %v527 = vtanh.pop %v526
    %529 = vrot.lane.b32.xlu0 %v527, 64
    %v530 = vpop.permute.xlu0 %529
    %v532 = vmul.f32 %v514, %v530
    %v533 = vpack.c.bf16 %v532, %v532
    %535 = vrot.lane.b32.xlu0 %v533, 32
    %v536 = vpop.permute.xlu0 %535
    %v538 = vsel %vm129, %v536, 0
    %540 = vmatprep.subr.bf16.mxu0 0
    %541 = vmatpush1.bf16.msra.mxu0 %v125
    %542 = vmatprep.subr.bf16.mxu0 0
    %543 = vmatpush1.bf16.msra.mxu0 %v126
    %544 = vmatprep.subr.bf16.mxu0 0
    %545 = vmatpush1.bf16.msra.mxu0 0
    %546 = vmatprep.subr.bf16.mxu0 0
    %547 = vmatpush1.bf16.msra.mxu0 0
    %548 = vmatprep.subr.bf16.mxu0 0
    %549 = vmatpush1.bf16.msra.mxu0 0
    %550 = vmatprep.subr.bf16.mxu0 0
    %551 = vmatpush1.bf16.msra.mxu0 0
    %552 = vmatprep.subr.bf16.mxu0 0
    %553 = vmatpush1.bf16.msra.mxu0 0
    %554 = vmatprep.subr.bf16.mxu0 0
    %555 = vmatpush1.bf16.msra.mxu0 0
    %556 = vmatprep.subr.bf16.mxu0 0
    %557 = vmatpush1.bf16.msra.mxu0 0
    %558 = vmatprep.subr.bf16.mxu0 0
    %559 = vmatpush1.bf16.msra.mxu0 0
    %560 = vmatprep.subr.bf16.mxu0 0
    %561 = vmatpush1.bf16.msra.mxu0 0
    %562 = vmatprep.subr.bf16.mxu0 0
    %563 = vmatpush1.bf16.msra.mxu0 0
    %564 = vmatprep.subr.bf16.mxu0 0
    %565 = vmatpush1.bf16.msra.mxu0 0
    %566 = vmatprep.subr.bf16.mxu0 0
    %567 = vmatpush1.bf16.msra.mxu0 0
    %568 = vmatprep.subr.bf16.mxu0 0
    %569 = vmatpush1.bf16.msra.mxu0 0
    %570 = vmatprep.subr.bf16.mxu0 0
    %571 = vmatpush1.bf16.msra.mxu0 0
    %572 = vmatprep.mubr.bf16.mxu0 0
    %573 = vmatmul.mubr.bf16.gmra.mrb[0].mxu0 %v538
    %v574 = vpop.f32.mrb[0].mxu0
    %v575 = vadd.f32 %v114, %v574
    %v576 = vpop.f32.mrb[0].mxu0
    %v577 = vpop.f32.mrb[0].mxu0
    %v578 = vpop.f32.mrb[0].mxu0
    %579 = vdwg.mxu0
    %s580 = scalar_lea.vmem [#allocation7], 16
    %v581 = vld [vmem:[%s580] sm:$0xff]
    %582 = vmatprep.subr.bf16.mxu0 0
    %583 = vmatpush1.bf16.msra.mxu0 %v183
    %584 = vmatprep.subr.bf16.mxu0 0
    %585 = vmatpush1.bf16.msra.mxu0 %v184
    %586 = vmatprep.subr.bf16.mxu0 0
    %587 = vmatpush1.bf16.msra.mxu0 0
    %588 = vmatprep.subr.bf16.mxu0 0
    %589 = vmatpush1.bf16.msra.mxu0 0
    %590 = vmatprep.subr.bf16.mxu0 0
    %591 = vmatpush1.bf16.msra.mxu0 0
    %592 = vmatprep.subr.bf16.mxu0 0
    %593 = vmatpush1.bf16.msra.mxu0 0
    %594 = vmatprep.subr.bf16.mxu0 0
    %595 = vmatpush1.bf16.msra.mxu0 0
    %596 = vmatprep.subr.bf16.mxu0 0
    %597 = vmatpush1.bf16.msra.mxu0 0
    %598 = vmatprep.subr.bf16.mxu0 0
    %599 = vmatpush1.bf16.msra.mxu0 0
    %600 = vmatprep.subr.bf16.mxu0 0
    %601 = vmatpush1.bf16.msra.mxu0 0
    %602 = vmatprep.subr.bf16.mxu0 0
    %603 = vmatpush1.bf16.msra.mxu0 0
    %604 = vmatprep.subr.bf16.mxu0 0
    %605 = vmatpush1.bf16.msra.mxu0 0
    %606 = vmatprep.subr.bf16.mxu0 0
    %607 = vmatpush1.bf16.msra.mxu0 0
    %608 = vmatprep.subr.bf16.mxu0 0
    %609 = vmatpush1.bf16.msra.mxu0 0
    %610 = vmatprep.subr.bf16.mxu0 0
    %611 = vmatpush1.bf16.msra.mxu0 0
    %612 = vmatprep.subr.bf16.mxu0 0
    %613 = vmatpush1.bf16.msra.mxu0 0
    %614 = vmatprep.mubr.bf16.mxu0 0
    %615 = vmatmul.mubr.bf16.gmra.mrb[0].mxu0 %v466
    %v616 = vpop.f32.mrb[0].mxu0
    %v617 = vadd.f32 0.0, %v616
    %v618 = vpop.f32.mrb[0].mxu0
    %v619 = vpop.f32.mrb[0].mxu0
    %v620 = vpop.f32.mrb[0].mxu0
    %621 = vdwg.mxu0
    %v622 = vadd.f32 %v581, %v617
    %v623 = vxor.u32 %v622, 2147483648
    %v624 = vmul.f32 %v623, 1.442695
    %v625 = vpow.pop %v624
    %v626 = vadd.f32 %v625, 1.0
    %v627 = vrcp.pop %v626
    %v628 = vmul.f32 1.0, %v627
    %v629 = vtanh.pop %v622
    %v630 = vmul.f32 %v628, %v454
    %632 = vrot.lane.b32.xlu0 %v629, 64
    %v633 = vpop.permute.xlu0 %632
    %v635 = vmul.f32 %v628, %v633
    %637 = vrot.lane.b32.xlu0 %v635, 32
    %v638 = vpop.permute.xlu0 %637
    %v640 = vadd.f32 %v630, %v638
    %v641 = vtanh.pop %v640
    %643 = vrot.lane.b32.xlu0 %v641, 64
    %v644 = vpop.permute.xlu0 %643
    %v646 = vmul.f32 %v628, %v644
    %v647 = vpack.c.bf16 %v646, %v646
    %649 = vrot.lane.b32.xlu0 %v647, 32
    %v650 = vpop.permute.xlu0 %649
    %v652 = vsel %vm129, %v650, 0
    %654 = vmatprep.subr.bf16.mxu0 0
    %655 = vmatpush1.bf16.msra.mxu0 %v271
    %656 = vmatprep.subr.bf16.mxu0 0
    %657 = vmatpush1.bf16.msra.mxu0 %v272
    %658 = vmatprep.subr.bf16.mxu0 0
    %659 = vmatpush1.bf16.msra.mxu0 0
    %660 = vmatprep.subr.bf16.mxu0 0
    %661 = vmatpush1.bf16.msra.mxu0 0
    %662 = vmatprep.subr.bf16.mxu0 0
    %663 = vmatpush1.bf16.msra.mxu0 0
    %664 = vmatprep.subr.bf16.mxu0 0
    %665 = vmatpush1.bf16.msra.mxu0 0
    %666 = vmatprep.subr.bf16.mxu0 0
    %667 = vmatpush1.bf16.msra.mxu0 0
    %668 = vmatprep.subr.bf16.mxu0 0
    %669 = vmatpush1.bf16.msra.mxu0 0
    %670 = vmatprep.subr.bf16.mxu0 0
    %671 = vmatpush1.bf16.msra.mxu0 0
    %672 = vmatprep.subr.bf16.mxu0 0
    %673 = vmatpush1.bf16.msra.mxu0 0
    %674 = vmatprep.subr.bf16.mxu0 0
    %675 = vmatpush1.bf16.msra.mxu0 0
    %676 = vmatprep.subr.bf16.mxu0 0
    %677 = vmatpush1.bf16.msra.mxu0 0
    %678 = vmatprep.subr.bf16.mxu0 0
    %679 = vmatpush1.bf16.msra.mxu0 0
    %680 = vmatprep.subr.bf16.mxu0 0
    %681 = vmatpush1.bf16.msra.mxu0 0
    %682 = vmatprep.subr.bf16.mxu0 0
    %683 = vmatpush1.bf16.msra.mxu0 0
    %684 = vmatprep.subr.bf16.mxu0 0
    %685 = vmatpush1.bf16.msra.mxu0 0
    %686 = vmatprep.mubr.bf16.mxu0 0
    %687 = vmatmul.mubr.bf16.gmra.mrb[0].mxu0 %v652
    %v688 = vpop.f32.mrb[0].mxu0
    %v689 = vadd.f32 0.0, %v688
    %v690 = vpop.f32.mrb[0].mxu0
    %v691 = vpop.f32.mrb[0].mxu0
    %v692 = vpop.f32.mrb[0].mxu0
    %693 = vdwg.mxu0
    %v694 = vadd.f32 %v575, %v689
    %v695 = vxor.u32 %v694, 2147483648
    %v696 = vmul.f32 %v695, 1.442695
    %v697 = vpow.pop %v696
    %v698 = vadd.f32 %v697, 1.0
    %v699 = vrcp.pop %v698
    %v700 = vmul.f32 1.0, %v699
    %v701 = vtanh.pop %v694
    %v702 = vmul.f32 %v700, %v526
    %704 = vrot.lane.b32.xlu0 %v701, 64
    %v705 = vpop.permute.xlu0 %704
    %v707 = vmul.f32 %v700, %v705
    %709 = vrot.lane.b32.xlu0 %v707, 32
    %v710 = vpop.permute.xlu0 %709
    %v712 = vadd.f32 %v702, %v710
    %v713 = vtanh.pop %v712
    %715 = vrot.lane.b32.xlu0 %v713, 64
    %v716 = vpop.permute.xlu0 %715
    %v718 = vmul.f32 %v700, %v716
    %v719 = vpack.c.bf16 %v718, %v718
    %721 = vrot.lane.b32.xlu0 %v719, 32
    %v722 = vpop.permute.xlu0 %721
    %v724 = vsel %vm129, %v722, 0
    %726 = vmatprep.subr.bf16.mxu0 0
    %727 = vmatpush1.bf16.msra.mxu0 %v125
    %728 = vmatprep.subr.bf16.mxu0 0
    %729 = vmatpush1.bf16.msra.mxu0 %v126
    %730 = vmatprep.subr.bf16.mxu0 0
    %731 = vmatpush1.bf16.msra.mxu0 0
    %732 = vmatprep.subr.bf16.mxu0 0
    %733 = vmatpush1.bf16.msra.mxu0 0
    %734 = vmatprep.subr.bf16.mxu0 0
    %735 = vmatpush1.bf16.msra.mxu0 0
    %736 = vmatprep.subr.bf16.mxu0 0
    %737 = vmatpush1.bf16.msra.mxu0 0
    %738 = vmatprep.subr.bf16.mxu0 0
    %739 = vmatpush1.bf16.msra.mxu0 0
    %740 = vmatprep.subr.bf16.mxu0 0
    %741 = vmatpush1.bf16.msra.mxu0 0
    %742 = vmatprep.subr.bf16.mxu0 0
    %743 = vmatpush1.bf16.msra.mxu0 0
    %744 = vmatprep.subr.bf16.mxu0 0
    %745 = vmatpush1.bf16.msra.mxu0 0
    %746 = vmatprep.subr.bf16.mxu0 0
    %747 = vmatpush1.bf16.msra.mxu0 0
    %748 = vmatprep.subr.bf16.mxu0 0
    %749 = vmatpush1.bf16.msra.mxu0 0
    %750 = vmatprep.subr.bf16.mxu0 0
    %751 = vmatpush1.bf16.msra.mxu0 0
    %752 = vmatprep.subr.bf16.mxu0 0
    %753 = vmatpush1.bf16.msra.mxu0 0
    %754 = vmatprep.subr.bf16.mxu0 0
    %755 = vmatpush1.bf16.msra.mxu0 0
    %756 = vmatprep.subr.bf16.mxu0 0
    %757 = vmatpush1.bf16.msra.mxu0 0
    %758 = vmatprep.mubr.bf16.mxu0 0
    %759 = vmatmul.mubr.bf16.gmra.mrb[0].mxu0 %v724
    %v760 = vpop.f32.mrb[0].mxu0
    %v761 = vadd.f32 %v114, %v760
    %v762 = vpop.f32.mrb[0].mxu0
    %v763 = vpop.f32.mrb[0].mxu0
    %v764 = vpop.f32.mrb[0].mxu0
    %765 = vdwg.mxu0
    %s766 = scalar_lea.vmem [#allocation7], 24
    %v767 = vld [vmem:[%s766] sm:$0xff]
    %768 = vmatprep.subr.bf16.mxu0 0
    %769 = vmatpush1.bf16.msra.mxu0 %v183
    %770 = vmatprep.subr.bf16.mxu0 0
    %771 = vmatpush1.bf16.msra.mxu0 %v184
    %772 = vmatprep.subr.bf16.mxu0 0
    %773 = vmatpush1.bf16.msra.mxu0 0
    %774 = vmatprep.subr.bf16.mxu0 0
    %775 = vmatpush1.bf16.msra.mxu0 0
    %776 = vmatprep.subr.bf16.mxu0 0
    %777 = vmatpush1.bf16.msra.mxu0 0
    %778 = vmatprep.subr.bf16.mxu0 0
    %779 = vmatpush1.bf16.msra.mxu0 0
    %780 = vmatprep.subr.bf16.mxu0 0
    %781 = vmatpush1.bf16.msra.mxu0 0
    %782 = vmatprep.subr.bf16.mxu0 0
    %783 = vmatpush1.bf16.msra.mxu0 0
    %784 = vmatprep.subr.bf16.mxu0 0
    %785 = vmatpush1.bf16.msra.mxu0 0
    %786 = vmatprep.subr.bf16.mxu0 0
    %787 = vmatpush1.bf16.msra.mxu0 0
    %788 = vmatprep.subr.bf16.mxu0 0
    %789 = vmatpush1.bf16.msra.mxu0 0
    %790 = vmatprep.subr.bf16.mxu0 0
    %791 = vmatpush1.bf16.msra.mxu0 0
    %792 = vmatprep.subr.bf16.mxu0 0
    %793 = vmatpush1.bf16.msra.mxu0 0
    %794 = vmatprep.subr.bf16.mxu0 0
    %795 = vmatpush1.bf16.msra.mxu0 0
    %796 = vmatprep.subr.bf16.mxu0 0
    %797 = vmatpush1.bf16.msra.mxu0 0
    %798 = vmatprep.subr.bf16.mxu0 0
    %799 = vmatpush1.bf16.msra.mxu0 0
    %800 = vmatprep.mubr.bf16.mxu0 0
    %801 = vmatmul.mubr.bf16.gmra.mrb[0].mxu0 %v652
    %v802 = vpop.f32.mrb[0].mxu0
    %v803 = vadd.f32 0.0, %v802
    %v804 = vpop.f32.mrb[0].mxu0
    %v805 = vpop.f32.mrb[0].mxu0
    %v806 = vpop.f32.mrb[0].mxu0
    %807 = vdwg.mxu0
    %v808 = vadd.f32 %v767, %v803
    %v809 = vxor.u32 %v808, 2147483648
    %v810 = vmul.f32 %v809, 1.442695
    %v811 = vpow.pop %v810
    %v812 = vadd.f32 %v811, 1.0
    %v813 = vrcp.pop %v812
    %v814 = vmul.f32 1.0, %v813
    %v815 = vtanh.pop %v808
    %v816 = vmul.f32 %v814, %v640
    %818 = vrot.lane.b32.xlu0 %v815, 64
    %v819 = vpop.permute.xlu0 %818
    %v821 = vmul.f32 %v814, %v819
    %823 = vrot.lane.b32.xlu0 %v821, 32
    %v824 = vpop.permute.xlu0 %823
    %v826 = vadd.f32 %v816, %v824
    %v827 = vtanh.pop %v826
    %829 = vrot.lane.b32.xlu0 %v827, 64
    %v830 = vpop.permute.xlu0 %829
    %v832 = vmul.f32 %v814, %v830
    %v833 = vpack.c.bf16 %v832, %v832
    %835 = vrot.lane.b32.xlu0 %v833, 32
    %v836 = vpop.permute.xlu0 %835
    %v838 = vsel %vm129, %v836, 0
    %840 = vmatprep.subr.bf16.mxu0 0
    %841 = vmatpush1.bf16.msra.mxu0 %v271
    %842 = vmatprep.subr.bf16.mxu0 0
    %843 = vmatpush1.bf16.msra.mxu0 %v272
    %844 = vmatprep.subr.bf16.mxu0 0
    %845 = vmatpush1.bf16.msra.mxu0 0
    %846 = vmatprep.subr.bf16.mxu0 0
    %847 = vmatpush1.bf16.msra.mxu0 0
    %848 = vmatprep.subr.bf16.mxu0 0
    %849 = vmatpush1.bf16.msra.mxu0 0
    %850 = vmatprep.subr.bf16.mxu0 0
    %851 = vmatpush1.bf16.msra.mxu0 0
    %852 = vmatprep.subr.bf16.mxu0 0
    %853 = vmatpush1.bf16.msra.mxu0 0
    %854 = vmatprep.subr.bf16.mxu0 0
    %855 = vmatpush1.bf16.msra.mxu0 0
    %856 = vmatprep.subr.bf16.mxu0 0
    %857 = vmatpush1.bf16.msra.mxu0 0
    %858 = vmatprep.subr.bf16.mxu0 0
    %859 = vmatpush1.bf16.msra.mxu0 0
    %860 = vmatprep.subr.bf16.mxu0 0
    %861 = vmatpush1.bf16.msra.mxu0 0
    %862 = vmatprep.subr.bf16.mxu0 0
    %863 = vmatpush1.bf16.msra.mxu0 0
    %864 = vmatprep.subr.bf16.mxu0 0
    %865 = vmatpush1.bf16.msra.mxu0 0
    %866 = vmatprep.subr.bf16.mxu0 0
    %867 = vmatpush1.bf16.msra.mxu0 0
    %868 = vmatprep.subr.bf16.mxu0 0
    %869 = vmatpush1.bf16.msra.mxu0 0
    %870 = vmatprep.subr.bf16.mxu0 0
    %871 = vmatpush1.bf16.msra.mxu0 0
    %872 = vmatprep.mubr.bf16.mxu0 0
    %873 = vmatmul.mubr.bf16.gmra.mrb[0].mxu0 %v838
    %v874 = vpop.f32.mrb[0].mxu0
    %v875 = vadd.f32 0.0, %v874
    %v876 = vpop.f32.mrb[0].mxu0
    %v877 = vpop.f32.mrb[0].mxu0
    %v878 = vpop.f32.mrb[0].mxu0
    %879 = vdwg.mxu0
    %v880 = vadd.f32 %v761, %v875
    %v881 = vxor.u32 %v880, 2147483648
    %v882 = vmul.f32 %v881, 1.442695
    %v883 = vpow.pop %v882
    %v884 = vadd.f32 %v883, 1.0
    %v885 = vrcp.pop %v884
    %v886 = vmul.f32 1.0, %v885
    %v887 = vtanh.pop %v880
    %v888 = vmul.f32 %v886, %v712
    %890 = vrot.lane.b32.xlu0 %v887, 64
    %v891 = vpop.permute.xlu0 %890
    %v893 = vmul.f32 %v886, %v891
    %895 = vrot.lane.b32.xlu0 %v893, 32
    %v896 = vpop.permute.xlu0 %895
    %v898 = vadd.f32 %v888, %v896
    %v899 = vtanh.pop %v898
    %901 = vrot.lane.b32.xlu0 %v899, 64
    %v902 = vpop.permute.xlu0 %901
    %v904 = vmul.f32 %v886, %v902
    %v905 = vpack.c.bf16 %v904, %v904
    %907 = vrot.lane.b32.xlu0 %v905, 32
    %v908 = vpop.permute.xlu0 %907
    %v910 = vsel %vm129, %v908, 0
    %912 = vmatprep.subr.bf16.mxu0 0
    %913 = vmatpush1.bf16.msra.mxu0 %v125
    %914 = vmatprep.subr.bf16.mxu0 0
    %915 = vmatpush1.bf16.msra.mxu0 %v126
    %916 = vmatprep.subr.bf16.mxu0 0
    %917 = vmatpush1.bf16.msra.mxu0 0
    %918 = vmatprep.subr.bf16.mxu0 0
    %919 = vmatpush1.bf16.msra.mxu0 0
    %920 = vmatprep.subr.bf16.mxu0 0
    %921 = vmatpush1.bf16.msra.mxu0 0
    %922 = vmatprep.subr.bf16.mxu0 0
    %923 = vmatpush1.bf16.msra.mxu0 0
    %924 = vmatprep.subr.bf16.mxu0 0
    %925 = vmatpush1.bf16.msra.mxu0 0
    %926 = vmatprep.subr.bf16.mxu0 0
    %927 = vmatpush1.bf16.msra.mxu0 0
    %928 = vmatprep.subr.bf16.mxu0 0
    %929 = vmatpush1.bf16.msra.mxu0 0
    %930 = vmatprep.subr.bf16.mxu0 0
    %931 = vmatpush1.bf16.msra.mxu0 0
    %932 = vmatprep.subr.bf16.mxu0 0
    %933 = vmatpush1.bf16.msra.mxu0 0
    %934 = vmatprep.subr.bf16.mxu0 0
    %935 = vmatpush1.bf16.msra.mxu0 0
    %936 = vmatprep.subr.bf16.mxu0 0
    %937 = vmatpush1.bf16.msra.mxu0 0
    %938 = vmatprep.subr.bf16.mxu0 0
    %939 = vmatpush1.bf16.msra.mxu0 0
    %940 = vmatprep.subr.bf16.mxu0 0
    %941 = vmatpush1.bf16.msra.mxu0 0
    %942 = vmatprep.subr.bf16.mxu0 0
    %943 = vmatpush1.bf16.msra.mxu0 0
    %944 = vmatprep.mubr.bf16.mxu0 0
    %945 = vmatmul.mubr.bf16.gmra.mrb[0].mxu0 %v910
    %v946 = vpop.f32.mrb[0].mxu0
    %v947 = vadd.f32 %v114, %v946
    %v948 = vpop.f32.mrb[0].mxu0
    %v949 = vpop.f32.mrb[0].mxu0
    %v950 = vpop.f32.mrb[0].mxu0
    %951 = vdwg.mxu0
    %s952 = scalar_lea.vmem [#allocation7], 32
    %v953 = vld [vmem:[%s952] sm:$0xff]
    %954 = vmatprep.subr.bf16.mxu0 0
    %955 = vmatpush1.bf16.msra.mxu0 %v183
    %956 = vmatprep.subr.bf16.mxu0 0
    %957 = vmatpush1.bf16.msra.mxu0 %v184
    %958 = vmatprep.subr.bf16.mxu0 0
    %959 = vmatpush1.bf16.msra.mxu0 0
    %960 = vmatprep.subr.bf16.mxu0 0
    %961 = vmatpush1.bf16.msra.mxu0 0
    %962 = vmatprep.subr.bf16.mxu0 0
    %963 = vmatpush1.bf16.msra.mxu0 0
    %964 = vmatprep.subr.bf16.mxu0 0
    %965 = vmatpush1.bf16.msra.mxu0 0
    %966 = vmatprep.subr.bf16.mxu0 0
    %967 = vmatpush1.bf16.msra.mxu0 0
    %968 = vmatprep.subr.bf16.mxu0 0
    %969 = vmatpush1.bf16.msra.mxu0 0
    %970 = vmatprep.subr.bf16.mxu0 0
    %971 = vmatpush1.bf16.msra.mxu0 0
    %972 = vmatprep.subr.bf16.mxu0 0
    %973 = vmatpush1.bf16.msra.mxu0 0
    %974 = vmatprep.subr.bf16.mxu0 0
    %975 = vmatpush1.bf16.msra.mxu0 0
    %976 = vmatprep.subr.bf16.mxu0 0
    %977 = vmatpush1.bf16.msra.mxu0 0
    %978 = vmatprep.subr.bf16.mxu0 0
    %979 = vmatpush1.bf16.msra.mxu0 0
    %980 = vmatprep.subr.bf16.mxu0 0
    %981 = vmatpush1.bf16.msra.mxu0 0
    %982 = vmatprep.subr.bf16.mxu0 0
    %983 = vmatpush1.bf16.msra.mxu0 0
    %984 = vmatprep.subr.bf16.mxu0 0
    %985 = vmatpush1.bf16.msra.mxu0 0
    %986 = vmatprep.mubr.bf16.mxu0 0
    %987 = vmatmul.mubr.bf16.gmra.mrb[0].mxu0 %v838
    %v988 = vpop.f32.mrb[0].mxu0
    %v989 = vadd.f32 0.0, %v988
    %v990 = vpop.f32.mrb[0].mxu0
    %v991 = vpop.f32.mrb[0].mxu0
    %v992 = vpop.f32.mrb[0].mxu0
    %993 = vdwg.mxu0
    %v994 = vadd.f32 %v953, %v989
    %v995 = vxor.u32 %v994, 2147483648
    %v996 = vmul.f32 %v995, 1.442695
    %v997 = vpow.pop %v996
    %v998 = vadd.f32 %v997, 1.0
    %v999 = vrcp.pop %v998
    %v1000 = vmul.f32 1.0, %v999
    %v1001 = vtanh.pop %v994
    %v1002 = vmul.f32 %v1000, %v826
    %1004 = vrot.lane.b32.xlu0 %v1001, 64
    %v1005 = vpop.permute.xlu0 %1004
    %v1007 = vmul.f32 %v1000, %v1005
    %1009 = vrot.lane.b32.xlu0 %v1007, 32
    %v1010 = vpop.permute.xlu0 %1009
    %v1012 = vadd.f32 %v1002, %v1010
    %v1013 = vtanh.pop %v1012
    %1015 = vrot.lane.b32.xlu0 %v1013, 64
    %v1016 = vpop.permute.xlu0 %1015
    %v1018 = vmul.f32 %v1000, %v1016
    %v1019 = vpack.c.bf16 %v1018, %v1018
    %1021 = vrot.lane.b32.xlu0 %v1019, 32
    %v1022 = vpop.permute.xlu0 %1021
    %v1024 = vsel %vm129, %v1022, 0
    %1026 = vmatprep.subr.bf16.mxu0 0
    %1027 = vmatpush1.bf16.msra.mxu0 %v271
    %1028 = vmatprep.subr.bf16.mxu0 0
    %1029 = vmatpush1.bf16.msra.mxu0 %v272
    %1030 = vmatprep.subr.bf16.mxu0 0
    %1031 = vmatpush1.bf16.msra.mxu0 0
    %1032 = vmatprep.subr.bf16.mxu0 0
    %1033 = vmatpush1.bf16.msra.mxu0 0
    %1034 = vmatprep.subr.bf16.mxu0 0
    %1035 = vmatpush1.bf16.msra.mxu0 0
    %1036 = vmatprep.subr.bf16.mxu0 0
    %1037 = vmatpush1.bf16.msra.mxu0 0
    %1038 = vmatprep.subr.bf16.mxu0 0
    %1039 = vmatpush1.bf16.msra.mxu0 0
    %1040 = vmatprep.subr.bf16.mxu0 0
    %1041 = vmatpush1.bf16.msra.mxu0 0
    %1042 = vmatprep.subr.bf16.mxu0 0
    %1043 = vmatpush1.bf16.msra.mxu0 0
    %1044 = vmatprep.subr.bf16.mxu0 0
    %1045 = vmatpush1.bf16.msra.mxu0 0
    %1046 = vmatprep.subr.bf16.mxu0 0
    %1047 = vmatpush1.bf16.msra.mxu0 0
    %1048 = vmatprep.subr.bf16.mxu0 0
    %1049 = vmatpush1.bf16.msra.mxu0 0
    %1050 = vmatprep.subr.bf16.mxu0 0
    %1051 = vmatpush1.bf16.msra.mxu0 0
    %1052 = vmatprep.subr.bf16.mxu0 0
    %1053 = vmatpush1.bf16.msra.mxu0 0
    %1054 = vmatprep.subr.bf16.mxu0 0
    %1055 = vmatpush1.bf16.msra.mxu0 0
    %1056 = vmatprep.subr.bf16.mxu0 0
    %1057 = vmatpush1.bf16.msra.mxu0 0
    %1058 = vmatprep.mubr.bf16.mxu0 0
    %1059 = vmatmul.mubr.bf16.gmra.mrb[0].mxu0 %v1024
    %v1060 = vpop.f32.mrb[0].mxu0
    %v1061 = vadd.f32 0.0, %v1060
    %v1062 = vpop.f32.mrb[0].mxu0
    %v1063 = vpop.f32.mrb[0].mxu0
    %v1064 = vpop.f32.mrb[0].mxu0
    %1065 = vdwg.mxu0
    %v1066 = vadd.f32 %v947, %v1061
    %v1067 = vxor.u32 %v1066, 2147483648
    %v1068 = vmul.f32 %v1067, 1.442695
    %v1069 = vpow.pop %v1068
    %v1070 = vadd.f32 %v1069, 1.0
    %v1071 = vrcp.pop %v1070
    %v1072 = vmul.f32 1.0, %v1071
    %v1073 = vtanh.pop %v1066
    %v1074 = vmul.f32 %v1072, %v898
    %1076 = vrot.lane.b32.xlu0 %v1073, 64
    %v1077 = vpop.permute.xlu0 %1076
    %v1079 = vmul.f32 %v1072, %v1077
    %1081 = vrot.lane.b32.xlu0 %v1079, 32
    %v1082 = vpop.permute.xlu0 %1081
    %v1084 = vadd.f32 %v1074, %v1082
    %v1085 = vtanh.pop %v1084
    %1087 = vrot.lane.b32.xlu0 %v1085, 64
    %v1088 = vpop.permute.xlu0 %1087
    %v1090 = vmul.f32 %v1072, %v1088
    %v1091 = vpack.c.bf16 %v1090, %v1090
    %1093 = vrot.lane.b32.xlu0 %v1091, 32
    %v1094 = vpop.permute.xlu0 %1093
    %v1096 = vsel %vm129, %v1094, 0
    %1098 = vmatprep.subr.bf16.mxu0 0
    %1099 = vmatpush1.bf16.msra.mxu0 %v125
    %1100 = vmatprep.subr.bf16.mxu0 0
    %1101 = vmatpush1.bf16.msra.mxu0 %v126
    %1102 = vmatprep.subr.bf16.mxu0 0
    %1103 = vmatpush1.bf16.msra.mxu0 0
    %1104 = vmatprep.subr.bf16.mxu0 0
    %1105 = vmatpush1.bf16.msra.mxu0 0
    %1106 = vmatprep.subr.bf16.mxu0 0
    %1107 = vmatpush1.bf16.msra.mxu0 0
    %1108 = vmatprep.subr.bf16.mxu0 0
    %1109 = vmatpush1.bf16.msra.mxu0 0
    %1110 = vmatprep.subr.bf16.mxu0 0
    %1111 = vmatpush1.bf16.msra.mxu0 0
    %1112 = vmatprep.subr.bf16.mxu0 0
    %1113 = vmatpush1.bf16.msra.mxu0 0
    %1114 = vmatprep.subr.bf16.mxu0 0
    %1115 = vmatpush1.bf16.msra.mxu0 0
    %1116 = vmatprep.subr.bf16.mxu0 0
    %1117 = vmatpush1.bf16.msra.mxu0 0
    %1118 = vmatprep.subr.bf16.mxu0 0
    %1119 = vmatpush1.bf16.msra.mxu0 0
    %1120 = vmatprep.subr.bf16.mxu0 0
    %1121 = vmatpush1.bf16.msra.mxu0 0
    %1122 = vmatprep.subr.bf16.mxu0 0
    %1123 = vmatpush1.bf16.msra.mxu0 0
    %1124 = vmatprep.subr.bf16.mxu0 0
    %1125 = vmatpush1.bf16.msra.mxu0 0
    %1126 = vmatprep.subr.bf16.mxu0 0
    %1127 = vmatpush1.bf16.msra.mxu0 0
    %1128 = vmatprep.subr.bf16.mxu0 0
    %1129 = vmatpush1.bf16.msra.mxu0 0
    %1130 = vmatprep.mubr.bf16.mxu0 0
    %1131 = vmatmul.mubr.bf16.gmra.mrb[0].mxu0 %v1096
    %v1132 = vpop.f32.mrb[0].mxu0
    %v1133 = vadd.f32 %v114, %v1132
    %v1134 = vpop.f32.mrb[0].mxu0
    %v1135 = vpop.f32.mrb[0].mxu0
    %v1136 = vpop.f32.mrb[0].mxu0
    %1137 = vdwg.mxu0
    %s1138 = scalar_lea.vmem [#allocation7], 40
    %v1139 = vld [vmem:[%s1138] sm:$0xff]
    %1140 = vmatprep.subr.bf16.mxu0 0
    %1141 = vmatpush1.bf16.msra.mxu0 %v183
    %1142 = vmatprep.subr.bf16.mxu0 0
    %1143 = vmatpush1.bf16.msra.mxu0 %v184
    %1144 = vmatprep.subr.bf16.mxu0 0
    %1145 = vmatpush1.bf16.msra.mxu0 0
    %1146 = vmatprep.subr.bf16.mxu0 0
    %1147 = vmatpush1.bf16.msra.mxu0 0
    %1148 = vmatprep.subr.bf16.mxu0 0
    %1149 = vmatpush1.bf16.msra.mxu0 0
    %1150 = vmatprep.subr.bf16.mxu0 0
    %1151 = vmatpush1.bf16.msra.mxu0 0
    %1152 = vmatprep.subr.bf16.mxu0 0
    %1153 = vmatpush1.bf16.msra.mxu0 0
    %1154 = vmatprep.subr.bf16.mxu0 0
    %1155 = vmatpush1.bf16.msra.mxu0 0
    %1156 = vmatprep.subr.bf16.mxu0 0
    %1157 = vmatpush1.bf16.msra.mxu0 0
    %1158 = vmatprep.subr.bf16.mxu0 0
    %1159 = vmatpush1.bf16.msra.mxu0 0
    %1160 = vmatprep.subr.bf16.mxu0 0
    %1161 = vmatpush1.bf16.msra.mxu0 0
    %1162 = vmatprep.subr.bf16.mxu0 0
    %1163 = vmatpush1.bf16.msra.mxu0 0
    %1164 = vmatprep.subr.bf16.mxu0 0
    %1165 = vmatpush1.bf16.msra.mxu0 0
    %1166 = vmatprep.subr.bf16.mxu0 0
    %1167 = vmatpush1.bf16.msra.mxu0 0
    %1168 = vmatprep.subr.bf16.mxu0 0
    %1169 = vmatpush1.bf16.msra.mxu0 0
    %1170 = vmatprep.subr.bf16.mxu0 0
    %1171 = vmatpush1.bf16.msra.mxu0 0
    %1172 = vmatprep.mubr.bf16.mxu0 0
    %1173 = vmatmul.mubr.bf16.gmra.mrb[0].mxu0 %v1024
    %v1174 = vpop.f32.mrb[0].mxu0
    %v1175 = vadd.f32 0.0, %v1174
    %v1176 = vpop.f32.mrb[0].mxu0
    %v1177 = vpop.f32.mrb[0].mxu0
    %v1178 = vpop.f32.mrb[0].mxu0
    %1179 = vdwg.mxu0
    %v1180 = vadd.f32 %v1139, %v1175
    %v1181 = vxor.u32 %v1180, 2147483648
    %v1182 = vmul.f32 %v1181, 1.442695
    %v1183 = vpow.pop %v1182
    %v1184 = vadd.f32 %v1183, 1.0
    %v1185 = vrcp.pop %v1184
    %v1186 = vmul.f32 1.0, %v1185
    %v1187 = vtanh.pop %v1180
    %v1188 = vmul.f32 %v1186, %v1012
    %1190 = vrot.lane.b32.xlu0 %v1187, 64
    %v1191 = vpop.permute.xlu0 %1190
    %v1193 = vmul.f32 %v1186, %v1191
    %1195 = vrot.lane.b32.xlu0 %v1193, 32
    %v1196 = vpop.permute.xlu0 %1195
    %v1198 = vadd.f32 %v1188, %v1196
    %v1199 = vtanh.pop %v1198
    %1201 = vrot.lane.b32.xlu0 %v1199, 64
    %v1202 = vpop.permute.xlu0 %1201
    %v1204 = vmul.f32 %v1186, %v1202
    %v1205 = vpack.c.bf16 %v1204, %v1204
    %1207 = vrot.lane.b32.xlu0 %v1205, 32
    %v1208 = vpop.permute.xlu0 %1207
    %v1210 = vsel %vm129, %v1208, 0
    %1212 = vmatprep.subr.bf16.mxu0 0
    %1213 = vmatpush1.bf16.msra.mxu0 %v271
    %1214 = vmatprep.subr.bf16.mxu0 0
    %1215 = vmatpush1.bf16.msra.mxu0 %v272
    %1216 = vmatprep.subr.bf16.mxu0 0
    %1217 = vmatpush1.bf16.msra.mxu0 0
    %1218 = vmatprep.subr.bf16.mxu0 0
    %1219 = vmatpush1.bf16.msra.mxu0 0
    %1220 = vmatprep.subr.bf16.mxu0 0
    %1221 = vmatpush1.bf16.msra.mxu0 0
    %1222 = vmatprep.subr.bf16.mxu0 0
    %1223 = vmatpush1.bf16.msra.mxu0 0
    %1224 = vmatprep.subr.bf16.mxu0 0
    %1225 = vmatpush1.bf16.msra.mxu0 0
    %1226 = vmatprep.subr.bf16.mxu0 0
    %1227 = vmatpush1.bf16.msra.mxu0 0
    %1228 = vmatprep.subr.bf16.mxu0 0
    %1229 = vmatpush1.bf16.msra.mxu0 0
    %1230 = vmatprep.subr.bf16.mxu0 0
    %1231 = vmatpush1.bf16.msra.mxu0 0
    %1232 = vmatprep.subr.bf16.mxu0 0
    %1233 = vmatpush1.bf16.msra.mxu0 0
    %1234 = vmatprep.subr.bf16.mxu0 0
    %1235 = vmatpush1.bf16.msra.mxu0 0
    %1236 = vmatprep.subr.bf16.mxu0 0
    %1237 = vmatpush1.bf16.msra.mxu0 0
    %1238 = vmatprep.subr.bf16.mxu0 0
    %1239 = vmatpush1.bf16.msra.mxu0 0
    %1240 = vmatprep.subr.bf16.mxu0 0
    %1241 = vmatpush1.bf16.msra.mxu0 0
    %1242 = vmatprep.subr.bf16.mxu0 0
    %1243 = vmatpush1.bf16.msra.mxu0 0
    %1244 = vmatprep.mubr.bf16.mxu0 0
    %1245 = vmatmul.mubr.bf16.gmra.mrb[0].mxu0 %v1210
    %v1246 = vpop.f32.mrb[0].mxu0
    %v1247 = vadd.f32 0.0, %v1246
    %v1248 = vpop.f32.mrb[0].mxu0
    %v1249 = vpop.f32.mrb[0].mxu0
    %v1250 = vpop.f32.mrb[0].mxu0
    %1251 = vdwg.mxu0
    %v1252 = vadd.f32 %v1133, %v1247
    %v1253 = vxor.u32 %v1252, 2147483648
    %v1254 = vmul.f32 %v1253, 1.442695
    %v1255 = vpow.pop %v1254
    %v1256 = vadd.f32 %v1255, 1.0
    %v1257 = vrcp.pop %v1256
    %v1258 = vmul.f32 1.0, %v1257
    %v1259 = vtanh.pop %v1252
    %v1260 = vmul.f32 %v1258, %v1084
    %1262 = vrot.lane.b32.xlu0 %v1259, 64
    %v1263 = vpop.permute.xlu0 %1262
    %v1265 = vmul.f32 %v1258, %v1263
    %1267 = vrot.lane.b32.xlu0 %v1265, 32
    %v1268 = vpop.permute.xlu0 %1267
    %v1270 = vadd.f32 %v1260, %v1268
    %v1271 = vtanh.pop %v1270
    %1273 = vrot.lane.b32.xlu0 %v1271, 64
    %v1274 = vpop.permute.xlu0 %1273
    %v1276 = vmul.f32 %v1258, %v1274
    %v1277 = vpack.c.bf16 %v1276, %v1276
    %1279 = vrot.lane.b32.xlu0 %v1277, 32
    %v1280 = vpop.permute.xlu0 %1279
    %v1282 = vsel %vm129, %v1280, 0
    %1284 = vmatprep.subr.bf16.mxu0 0
    %1285 = vmatpush1.bf16.msra.mxu0 %v125
    %1286 = vmatprep.subr.bf16.mxu0 0
    %1287 = vmatpush1.bf16.msra.mxu0 %v126
    %1288 = vmatprep.subr.bf16.mxu0 0
    %1289 = vmatpush1.bf16.msra.mxu0 0
    %1290 = vmatprep.subr.bf16.mxu0 0
    %1291 = vmatpush1.bf16.msra.mxu0 0
    %1292 = vmatprep.subr.bf16.mxu0 0
    %1293 = vmatpush1.bf16.msra.mxu0 0
    %1294 = vmatprep.subr.bf16.mxu0 0
    %1295 = vmatpush1.bf16.msra.mxu0 0
    %1296 = vmatprep.subr.bf16.mxu0 0
    %1297 = vmatpush1.bf16.msra.mxu0 0
    %1298 = vmatprep.subr.bf16.mxu0 0
    %1299 = vmatpush1.bf16.msra.mxu0 0
    %1300 = vmatprep.subr.bf16.mxu0 0
    %1301 = vmatpush1.bf16.msra.mxu0 0
    %1302 = vmatprep.subr.bf16.mxu0 0
    %1303 = vmatpush1.bf16.msra.mxu0 0
    %1304 = vmatprep.subr.bf16.mxu0 0
    %1305 = vmatpush1.bf16.msra.mxu0 0
    %1306 = vmatprep.subr.bf16.mxu0 0
    %1307 = vmatpush1.bf16.msra.mxu0 0
    %1308 = vmatprep.subr.bf16.mxu0 0
    %1309 = vmatpush1.bf16.msra.mxu0 0
    %1310 = vmatprep.subr.bf16.mxu0 0
    %1311 = vmatpush1.bf16.msra.mxu0 0
    %1312 = vmatprep.subr.bf16.mxu0 0
    %1313 = vmatpush1.bf16.msra.mxu0 0
    %1314 = vmatprep.subr.bf16.mxu0 0
    %1315 = vmatpush1.bf16.msra.mxu0 0
    %1316 = vmatprep.mubr.bf16.mxu0 0
    %1317 = vmatmul.mubr.bf16.gmra.mrb[0].mxu0 %v1282
    %v1318 = vpop.f32.mrb[0].mxu0
    %v1319 = vadd.f32 %v114, %v1318
    %v1320 = vpop.f32.mrb[0].mxu0
    %v1321 = vpop.f32.mrb[0].mxu0
    %v1322 = vpop.f32.mrb[0].mxu0
    %1323 = vdwg.mxu0
    %s1324 = scalar_lea.vmem [#allocation7], 48
    %v1325 = vld [vmem:[%s1324] sm:$0xff]
    %1326 = vmatprep.subr.bf16.mxu0 0
    %1327 = vmatpush1.bf16.msra.mxu0 %v183
    %1328 = vmatprep.subr.bf16.mxu0 0
    %1329 = vmatpush1.bf16.msra.mxu0 %v184
    %1330 = vmatprep.subr.bf16.mxu0 0
    %1331 = vmatpush1.bf16.msra.mxu0 0
    %1332 = vmatprep.subr.bf16.mxu0 0
    %1333 = vmatpush1.bf16.msra.mxu0 0
    %1334 = vmatprep.subr.bf16.mxu0 0
    %1335 = vmatpush1.bf16.msra.mxu0 0
    %1336 = vmatprep.subr.bf16.mxu0 0
    %1337 = vmatpush1.bf16.msra.mxu0 0
    %1338 = vmatprep.subr.bf16.mxu0 0
    %1339 = vmatpush1.bf16.msra.mxu0 0
    %1340 = vmatprep.subr.bf16.mxu0 0
    %1341 = vmatpush1.bf16.msra.mxu0 0
    %1342 = vmatprep.subr.bf16.mxu0 0
    %1343 = vmatpush1.bf16.msra.mxu0 0
    %1344 = vmatprep.subr.bf16.mxu0 0
    %1345 = vmatpush1.bf16.msra.mxu0 0
    %1346 = vmatprep.subr.bf16.mxu0 0
    %1347 = vmatpush1.bf16.msra.mxu0 0
    %1348 = vmatprep.subr.bf16.mxu0 0
    %1349 = vmatpush1.bf16.msra.mxu0 0
    %1350 = vmatprep.subr.bf16.mxu0 0
    %1351 = vmatpush1.bf16.msra.mxu0 0
    %1352 = vmatprep.subr.bf16.mxu0 0
    %1353 = vmatpush1.bf16.msra.mxu0 0
    %1354 = vmatprep.subr.bf16.mxu0 0
    %1355 = vmatpush1.bf16.msra.mxu0 0
    %1356 = vmatprep.subr.bf16.mxu0 0
    %1357 = vmatpush1.bf16.msra.mxu0 0
    %1358 = vmatprep.mubr.bf16.mxu0 0
    %1359 = vmatmul.mubr.bf16.gmra.mrb[0].mxu0 %v1210
    %v1360 = vpop.f32.mrb[0].mxu0
    %v1361 = vadd.f32 0.0, %v1360
    %v1362 = vpop.f32.mrb[0].mxu0
    %v1363 = vpop.f32.mrb[0].mxu0
    %v1364 = vpop.f32.mrb[0].mxu0
    %1365 = vdwg.mxu0
    %v1366 = vadd.f32 %v1325, %v1361
    %v1367 = vxor.u32 %v1366, 2147483648
    %v1368 = vmul.f32 %v1367, 1.442695
    %v1369 = vpow.pop %v1368
    %v1370 = vadd.f32 %v1369, 1.0
    %v1371 = vrcp.pop %v1370
    %v1372 = vmul.f32 1.0, %v1371
    %v1373 = vtanh.pop %v1366
    %v1374 = vmul.f32 %v1372, %v1198
    %1376 = vrot.lane.b32.xlu0 %v1373, 64
    %v1377 = vpop.permute.xlu0 %1376
    %v1379 = vmul.f32 %v1372, %v1377
    %1381 = vrot.lane.b32.xlu0 %v1379, 32
    %v1382 = vpop.permute.xlu0 %1381
    %v1384 = vadd.f32 %v1374, %v1382
    %v1385 = vtanh.pop %v1384
    %1387 = vrot.lane.b32.xlu0 %v1385, 64
    %v1388 = vpop.permute.xlu0 %1387
    %v1390 = vmul.f32 %v1372, %v1388
    %v1391 = vpack.c.bf16 %v1390, %v1390
    %1393 = vrot.lane.b32.xlu0 %v1391, 32
    %v1394 = vpop.permute.xlu0 %1393
    %v1396 = vsel %vm129, %v1394, 0
    %1398 = vmatprep.subr.bf16.mxu0 0
    %1399 = vmatpush1.bf16.msra.mxu0 %v271
    %1400 = vmatprep.subr.bf16.mxu0 0
    %1401 = vmatpush1.bf16.msra.mxu0 %v272
    %1402 = vmatprep.subr.bf16.mxu0 0
    %1403 = vmatpush1.bf16.msra.mxu0 0
    %1404 = vmatprep.subr.bf16.mxu0 0
    %1405 = vmatpush1.bf16.msra.mxu0 0
    %1406 = vmatprep.subr.bf16.mxu0 0
    %1407 = vmatpush1.bf16.msra.mxu0 0
    %1408 = vmatprep.subr.bf16.mxu0 0
    %1409 = vmatpush1.bf16.msra.mxu0 0
    %1410 = vmatprep.subr.bf16.mxu0 0
    %1411 = vmatpush1.bf16.msra.mxu0 0
    %1412 = vmatprep.subr.bf16.mxu0 0
    %1413 = vmatpush1.bf16.msra.mxu0 0
    %1414 = vmatprep.subr.bf16.mxu0 0
    %1415 = vmatpush1.bf16.msra.mxu0 0
    %1416 = vmatprep.subr.bf16.mxu0 0
    %1417 = vmatpush1.bf16.msra.mxu0 0
    %1418 = vmatprep.subr.bf16.mxu0 0
    %1419 = vmatpush1.bf16.msra.mxu0 0
    %1420 = vmatprep.subr.bf16.mxu0 0
    %1421 = vmatpush1.bf16.msra.mxu0 0
    %1422 = vmatprep.subr.bf16.mxu0 0
    %1423 = vmatpush1.bf16.msra.mxu0 0
    %1424 = vmatprep.subr.bf16.mxu0 0
    %1425 = vmatpush1.bf16.msra.mxu0 0
    %1426 = vmatprep.subr.bf16.mxu0 0
    %1427 = vmatpush1.bf16.msra.mxu0 0
    %1428 = vmatprep.subr.bf16.mxu0 0
    %1429 = vmatpush1.bf16.msra.mxu0 0
    %1430 = vmatprep.mubr.bf16.mxu0 0
    %1431 = vmatmul.mubr.bf16.gmra.mrb[0].mxu0 %v1396
    %v1432 = vpop.f32.mrb[0].mxu0
    %v1433 = vadd.f32 0.0, %v1432
    %v1434 = vpop.f32.mrb[0].mxu0
    %v1435 = vpop.f32.mrb[0].mxu0
    %v1436 = vpop.f32.mrb[0].mxu0
    %1437 = vdwg.mxu0
    %v1438 = vadd.f32 %v1319, %v1433
    %v1439 = vxor.u32 %v1438, 2147483648
    %v1440 = vmul.f32 %v1439, 1.442695
    %v1441 = vpow.pop %v1440
    %v1442 = vadd.f32 %v1441, 1.0
    %v1443 = vrcp.pop %v1442
    %v1444 = vmul.f32 1.0, %v1443
    %v1445 = vtanh.pop %v1438
    %v1446 = vmul.f32 %v1444, %v1270
    %1448 = vrot.lane.b32.xlu0 %v1445, 64
    %v1449 = vpop.permute.xlu0 %1448
    %v1451 = vmul.f32 %v1444, %v1449
    %1453 = vrot.lane.b32.xlu0 %v1451, 32
    %v1454 = vpop.permute.xlu0 %1453
    %v1456 = vadd.f32 %v1446, %v1454
    %v1457 = vtanh.pop %v1456
    %1459 = vrot.lane.b32.xlu0 %v1457, 64
    %v1460 = vpop.permute.xlu0 %1459
    %v1462 = vmul.f32 %v1444, %v1460
    %v1463 = vpack.c.bf16 %v1462, %v1462
    %1465 = vrot.lane.b32.xlu0 %v1463, 32
    %v1466 = vpop.permute.xlu0 %1465
    %v1468 = vsel %vm129, %v1466, 0
    %1470 = vmatprep.subr.bf16.mxu0 0
    %1471 = vmatpush1.bf16.msra.mxu0 %v125
    %1472 = vmatprep.subr.bf16.mxu0 0
    %1473 = vmatpush1.bf16.msra.mxu0 %v126
    %1474 = vmatprep.subr.bf16.mxu0 0
    %1475 = vmatpush1.bf16.msra.mxu0 0
    %1476 = vmatprep.subr.bf16.mxu0 0
    %1477 = vmatpush1.bf16.msra.mxu0 0
    %1478 = vmatprep.subr.bf16.mxu0 0
    %1479 = vmatpush1.bf16.msra.mxu0 0
    %1480 = vmatprep.subr.bf16.mxu0 0
    %1481 = vmatpush1.bf16.msra.mxu0 0
    %1482 = vmatprep.subr.bf16.mxu0 0
    %1483 = vmatpush1.bf16.msra.mxu0 0
    %1484 = vmatprep.subr.bf16.mxu0 0
    %1485 = vmatpush1.bf16.msra.mxu0 0
    %1486 = vmatprep.subr.bf16.mxu0 0
    %1487 = vmatpush1.bf16.msra.mxu0 0
    %1488 = vmatprep.subr.bf16.mxu0 0
    %1489 = vmatpush1.bf16.msra.mxu0 0
    %1490 = vmatprep.subr.bf16.mxu0 0
    %1491 = vmatpush1.bf16.msra.mxu0 0
    %1492 = vmatprep.subr.bf16.mxu0 0
    %1493 = vmatpush1.bf16.msra.mxu0 0
    %1494 = vmatprep.subr.bf16.mxu0 0
    %1495 = vmatpush1.bf16.msra.mxu0 0
    %1496 = vmatprep.subr.bf16.mxu0 0
    %1497 = vmatpush1.bf16.msra.mxu0 0
    %1498 = vmatprep.subr.bf16.mxu0 0
    %1499 = vmatpush1.bf16.msra.mxu0 0
    %1500 = vmatprep.subr.bf16.mxu0 0
    %1501 = vmatpush1.bf16.msra.mxu0 0
    %1502 = vmatprep.mubr.bf16.mxu0 0
    %1503 = vmatmul.mubr.bf16.gmra.mrb[0].mxu0 %v1468
    %v1504 = vpop.f32.mrb[0].mxu0
    %v1505 = vadd.f32 %v114, %v1504
    %v1506 = vpop.f32.mrb[0].mxu0
    %v1507 = vpop.f32.mrb[0].mxu0
    %v1508 = vpop.f32.mrb[0].mxu0
    %1509 = vdwg.mxu0
    %s1510 = scalar_lea.vmem [#allocation7], 56
    %v1511 = vld [vmem:[%s1510] sm:$0xff]
    %1512 = vmatprep.subr.bf16.mxu0 0
    %1513 = vmatpush1.bf16.msra.mxu0 %v183
    %1514 = vmatprep.subr.bf16.mxu0 0
    %1515 = vmatpush1.bf16.msra.mxu0 %v184
    %1516 = vmatprep.subr.bf16.mxu0 0
    %1517 = vmatpush1.bf16.msra.mxu0 0
    %1518 = vmatprep.subr.bf16.mxu0 0
    %1519 = vmatpush1.bf16.msra.mxu0 0
    %1520 = vmatprep.subr.bf16.mxu0 0
    %1521 = vmatpush1.bf16.msra.mxu0 0
    %1522 = vmatprep.subr.bf16.mxu0 0
    %1523 = vmatpush1.bf16.msra.mxu0 0
    %1524 = vmatprep.subr.bf16.mxu0 0
    %1525 = vmatpush1.bf16.msra.mxu0 0
    %1526 = vmatprep.subr.bf16.mxu0 0
    %1527 = vmatpush1.bf16.msra.mxu0 0
    %1528 = vmatprep.subr.bf16.mxu0 0
    %1529 = vmatpush1.bf16.msra.mxu0 0
    %1530 = vmatprep.subr.bf16.mxu0 0
    %1531 = vmatpush1.bf16.msra.mxu0 0
    %1532 = vmatprep.subr.bf16.mxu0 0
    %1533 = vmatpush1.bf16.msra.mxu0 0
    %1534 = vmatprep.subr.bf16.mxu0 0
    %1535 = vmatpush1.bf16.msra.mxu0 0
    %1536 = vmatprep.subr.bf16.mxu0 0
    %1537 = vmatpush1.bf16.msra.mxu0 0
    %1538 = vmatprep.subr.bf16.mxu0 0
    %1539 = vmatpush1.bf16.msra.mxu0 0
    %1540 = vmatprep.subr.bf16.mxu0 0
    %1541 = vmatpush1.bf16.msra.mxu0 0
    %1542 = vmatprep.subr.bf16.mxu0 0
    %1543 = vmatpush1.bf16.msra.mxu0 0
    %1544 = vmatprep.mubr.bf16.mxu0 0
    %1545 = vmatmul.mubr.bf16.gmra.mrb[0].mxu0 %v1396
    %v1546 = vpop.f32.mrb[0].mxu0
    %v1547 = vadd.f32 0.0, %v1546
    %v1548 = vpop.f32.mrb[0].mxu0
    %v1549 = vpop.f32.mrb[0].mxu0
    %v1550 = vpop.f32.mrb[0].mxu0
    %1551 = vdwg.mxu0
    %v1552 = vadd.f32 %v1511, %v1547
    %v1553 = vxor.u32 %v1552, 2147483648
    %v1554 = vmul.f32 %v1553, 1.442695
    %v1555 = vpow.pop %v1554
    %v1556 = vadd.f32 %v1555, 1.0
    %v1557 = vrcp.pop %v1556
    %v1558 = vmul.f32 1.0, %v1557
    %v1559 = vtanh.pop %v1552
    %v1560 = vmul.f32 %v1558, %v1384
    %1562 = vrot.lane.b32.xlu0 %v1559, 64
    %v1563 = vpop.permute.xlu0 %1562
    %v1565 = vmul.f32 %v1558, %v1563
    %1567 = vrot.lane.b32.xlu0 %v1565, 32
    %v1568 = vpop.permute.xlu0 %1567
    %v1570 = vadd.f32 %v1560, %v1568
    %v1571 = vtanh.pop %v1570
    %1573 = vrot.lane.b32.xlu0 %v1571, 64
    %v1574 = vpop.permute.xlu0 %1573
    %v1576 = vmul.f32 %v1558, %v1574
    %v1577 = vpack.c.bf16 %v1576, %v1576
    %1579 = vrot.lane.b32.xlu0 %v1577, 32
    %v1580 = vpop.permute.xlu0 %1579
    %v1582 = vsel %vm129, %v1580, 0
    %1584 = vmatprep.subr.bf16.mxu0 0
    %1585 = vmatpush1.bf16.msra.mxu0 %v271
    %1586 = vmatprep.subr.bf16.mxu0 0
    %1587 = vmatpush1.bf16.msra.mxu0 %v272
    %1588 = vmatprep.subr.bf16.mxu0 0
    %1589 = vmatpush1.bf16.msra.mxu0 0
    %1590 = vmatprep.subr.bf16.mxu0 0
    %1591 = vmatpush1.bf16.msra.mxu0 0
    %1592 = vmatprep.subr.bf16.mxu0 0
    %1593 = vmatpush1.bf16.msra.mxu0 0
    %1594 = vmatprep.subr.bf16.mxu0 0
    %1595 = vmatpush1.bf16.msra.mxu0 0
    %1596 = vmatprep.subr.bf16.mxu0 0
    %1597 = vmatpush1.bf16.msra.mxu0 0
    %1598 = vmatprep.subr.bf16.mxu0 0
    %1599 = vmatpush1.bf16.msra.mxu0 0
    %1600 = vmatprep.subr.bf16.mxu0 0
    %1601 = vmatpush1.bf16.msra.mxu0 0
    %1602 = vmatprep.subr.bf16.mxu0 0
    %1603 = vmatpush1.bf16.msra.mxu0 0
    %1604 = vmatprep.subr.bf16.mxu0 0
    %1605 = vmatpush1.bf16.msra.mxu0 0
    %1606 = vmatprep.subr.bf16.mxu0 0
    %1607 = vmatpush1.bf16.msra.mxu0 0
    %1608 = vmatprep.subr.bf16.mxu0 0
    %1609 = vmatpush1.bf16.msra.mxu0 0
    %1610 = vmatprep.subr.bf16.mxu0 0
    %1611 = vmatpush1.bf16.msra.mxu0 0
    %1612 = vmatprep.subr.bf16.mxu0 0
    %1613 = vmatpush1.bf16.msra.mxu0 0
    %1614 = vmatprep.subr.bf16.mxu0 0
    %1615 = vmatpush1.bf16.msra.mxu0 0
    %1616 = vmatprep.mubr.bf16.mxu0 0
    %1617 = vmatmul.mubr.bf16.gmra.mrb[0].mxu0 %v1582
    %v1618 = vpop.f32.mrb[0].mxu0
    %v1619 = vadd.f32 0.0, %v1618
    %v1620 = vpop.f32.mrb[0].mxu0
    %v1621 = vpop.f32.mrb[0].mxu0
    %v1622 = vpop.f32.mrb[0].mxu0
    %1623 = vdwg.mxu0
    %v1624 = vadd.f32 %v1505, %v1619
    %v1625 = vxor.u32 %v1624, 2147483648
    %v1626 = vmul.f32 %v1625, 1.442695
    %v1627 = vpow.pop %v1626
    %v1628 = vadd.f32 %v1627, 1.0
    %v1629 = vrcp.pop %v1628
    %v1630 = vmul.f32 1.0, %v1629
    %v1631 = vtanh.pop %v1624
    %v1632 = vmul.f32 %v1630, %v1456
    %1634 = vrot.lane.b32.xlu0 %v1631, 64
    %v1635 = vpop.permute.xlu0 %1634
    %v1637 = vmul.f32 %v1630, %v1635
    %1639 = vrot.lane.b32.xlu0 %v1637, 32
    %v1640 = vpop.permute.xlu0 %1639
    %v1642 = vadd.f32 %v1632, %v1640
    %v1643 = vtanh.pop %v1642
    %1645 = vrot.lane.b32.xlu0 %v1643, 64
    %v1646 = vpop.permute.xlu0 %1645
    %v1648 = vmul.f32 %v1630, %v1646
    %1650 = vrot.lane.b32.xlu0 %v1576, 32
    %v1651 = vpop.permute.xlu0 %1650
    %1653 = vst.msk [vmem:[#allocation2] sm:$0xff] %vm129, %v1651
    %1655 = vrot.lane.b32.xlu0 %v1570, 96
    %v1656 = vpop.permute.xlu0 %1655
    %1658 = vst.msk [vmem:[#allocation3] sm:$0xff] %vm129, %v1656
    %1660 = vrot.lane.b32.xlu0 %v1648, 32
    %v1661 = vpop.permute.xlu0 %1660
    %1663 = vst.msk [vmem:[#allocation4] sm:$0xff] %vm129, %v1661
    %1665 = vrot.lane.b32.xlu0 %v1642, 96
    %v1666 = vpop.permute.xlu0 %1665
    %1668 = vst.msk [vmem:[#allocation5] sm:$0xff] %vm129, %v1666
    // Predicated region
    $region50: #{tpu_custom_call.1} parent=1 // pred_check
      %p1669 = pneg %p84
    $region51: #{tpu_custom_call.1} parent=1 // pred_check_branch
      %1671 = sbr.rel (%p1669) target = $region53
    $region52: #{tpu_custom_call.1} parent=1 // pred_region
      %v1672 = vld [vmem:[%s5] sm:$0x1]
      %v1674 = vlaneseq
      %v1675 = vshrl.u32 %v1674, 7
      %v1676 = vsub.s32 0, %v1675
      %v1677 = vrot.slane %v1672, %v1676
      %1678 = vrot.lane.b32.xlu0 %v1677, 96
      %v1679 = vpop.permute.xlu0 %1678
      %v1681 = vmul.f32 %v1648, %v1679
      %1683 = vrot.lane.b32.xlu0 %v1681, 32
      %v1684 = vpop.permute.xlu0 %1683
      %v1686 = vsel %vm129, %v1684, 0.0
      %1687 = vadd.xlane.f32.xlu0 %v1686
      %v1688 = vpop.xlane.xlu0 %1687
      %v1689 = vld [vmem:[#allocation6] sm:$0x1]
      %v1691 = vlaneseq
      %v1692 = vshrl.u32 %v1691, 7
      %v1693 = vsub.s32 0, %v1692
      %v1694 = vrot.slane %v1689, %v1693
      %v1696 = vadd.f32 %v1688, %v1694
      %vm1697 = vcmask 7168
      %1698 = vst.msk [vmem:[%s7] sm:$0xff] %vm1697, %v1696
    $region53: #{tpu_custom_call.1} parent=1 // pred_fallthru
      _
    // Predicated region
    $region54: #{tpu_custom_call.1} parent=1 // pred_check
      _
    $region55: #{tpu_custom_call.1} parent=1 // pred_check_branch
      %1700 = sbr.rel (0) target = $region57
    $region56: #{tpu_custom_call.1} parent=1 // pred_region
      _
    $region57: #{tpu_custom_call.1} parent=1 // pred_fallthru
      _
    // Predicated region
    $region58: #{tpu_custom_call.1} parent=1 // pred_check
      _
    $region59: #{tpu_custom_call.1} parent=1 // pred_check_branch
      %1702 = sbr.rel (0) target = $region61
    $region60: #{tpu_custom_call.1} parent=1 // pred_region
      _
    $region61: #{tpu_custom_call.1} parent=1 // pred_fallthru
      _
    %1703 = vsyncpa [#allocation8], 1
    %1704 = vsyncpa [#allocation10], 1
    %1705 = vsyncpa [#allocation13], 1

</llo_original>
